<compile_context>
chip_gen: v7x
topology: tpu7x:2x2x1
jax: 0.10.0
libtpu: 0.0.40
codegen_flags: <defaults>
</compile_context>

<pallas_src>
import jax
import jax.numpy as jnp
from jax import lax
from jax.experimental import pallas as pl
from jax.experimental.pallas import tpu as pltpu


_WINDOW = 16                      # row DMAs kept in flight per output tile
_MIN_PALLAS_BYTES = 1 << 20       # below ~1 MiB, XLA gather wins on launch overhead
_MAX_SMEM_PERM = 64 * 1024        # scalar-prefetched perm must fit SMEM comfortably


def _round_up(v, m):
    return (v + m - 1) // m * m


def _gather_kernel(perm_ref, x_hbm, o_ref, sem):
    # perm_ref: SMEM int32 (n_pad,)   -- scalar-prefetched permutation
    # x_hbm   : HBM  (n, d)           -- full feature matrix (memory_space=ANY)
    # o_ref   : VMEM (tm, d)          -- output tile for this grid step
    # sem     : DMA semaphores (_WINDOW,)
    tm = o_ref.shape[0]
    base = pl.program_id(0) * tm

    def start_row(r, slot):
        src = perm_ref[base + r]
        pltpu.make_async_copy(x_hbm.at[src], o_ref.at[r], sem.at[slot]).start()

    def wait_row(r, slot):
        # Only the transfer size matters for the wait; mirror the started copy
        # with a same-shaped (one row of d elements) descriptor.
        pltpu.make_async_copy(x_hbm.at[0], o_ref.at[r], sem.at[slot]).wait()

    # Prime the in-flight window (static unrolled: _WINDOW copies).
    for r in range(_WINDOW):
        start_row(r, r)

    # Steady state: retire row r, immediately refill its slot with row r + W.
    def steady(r, _):
        slot = r % _WINDOW
        wait_row(r, slot)
        start_row(r + _WINDOW, slot)
        return 0

    lax.fori_loop(0, tm - _WINDOW, steady, 0)

    # Drain the last _WINDOW in-flight copies before the tile is written back.
    for i in range(_WINDOW):
        r = tm - _WINDOW + i
        wait_row(r, r % _WINDOW)


def _pick_tm(n, d, itemsize):
    # Large output tiles amortize per-grid-step overhead; cap one tile around
    # ~2 MiB so the double-buffered pair stays ~4 MiB of VMEM.
    by_vmem = (2 << 20) // max(d * itemsize, 1)
    tm = min(1024, by_vmem, _round_up(n, 8))
    tm = _round_up(max(tm, _WINDOW), 8)
    return tm


def _pallas_shuffle(x, perm, *, tm=None):
    n, d = x.shape
    itemsize = x.dtype.itemsize
    if tm is None:
        tm = _pick_tm(n, d, itemsize)
    assert tm % 8 == 0 and tm >= _WINDOW, "tm must be a multiple of 8 and >= window"
    n_pad = _round_up(n, tm)

    perm_p = perm.astype(jnp.int32)
    if n_pad != n:
        # Padded entries gather row 0 (always valid); extra rows sliced below.
        perm_p = jnp.pad(perm_p, (0, n_pad - n))

    # VMEM budget: double-buffered (tm, d) output tile plus slack.  Tiny by
    # construction; capped well under v7x's 64 MiB physical VMEM.
    needed = 2 * tm * d * itemsize + (2 << 20)
    vmem_limit = int(min(max(needed, 16 << 20), 40 << 20))

    out = pl.pallas_call(
        _gather_kernel,
        out_shape=jax.ShapeDtypeStruct((n_pad, d), x.dtype),
        grid_spec=pltpu.PrefetchScalarGridSpec(
            num_scalar_prefetch=1,                       # perm -> SMEM
            grid=(n_pad // tm,),
            in_specs=[pl.BlockSpec(memory_space=pl.ANY)],  # x stays in HBM
            out_specs=pl.BlockSpec((tm, d), lambda i, perm: (i, 0)),
            scratch_shapes=[pltpu.SemaphoreType.DMA((_WINDOW,))],
        ),
        compiler_params=pltpu.CompilerParams(
            # Row tiles are fully independent: shard across TensorCores on v7x
            # (near no-op on single-TC v5e/v6e).
            dimension_semantics=("parallel",),
            vmem_limit_bytes=vmem_limit,
        ),
    )(perm_p, x)
    return out[:n] if n_pad != n else out


def feature_shuffle(x, edge_index, perm, *, use_pallas=None, tm=None):
    """Pallas equivalent of FeatureShuffle.forward.

    Returns (x[perm, :], edge_index).  `perm` replaces the module's
    np.random.permutation draw (host RNG has no in-kernel equivalent).
    """
    n, d = x.shape
    if use_pallas is None:
        big_enough = n * d * x.dtype.itemsize >= _MIN_PALLAS_BYTES
        perm_fits_smem = n <= _MAX_SMEM_PERM
        use_pallas = big_enough and perm_fits_smem

    if use_pallas:
        shuf = _pallas_shuffle(x, perm, tm=tm)
    else:
        # TODO(synk): for graphs with > _MAX_SMEM_PERM nodes, tile perm into
        # SMEM per grid step instead of scalar-prefetching it whole; plain XLA
        # gather covers that (and the tiny-input) case for now.
        shuf = x[perm, :]
    return shuf, edge_index


if __name__ == "__main__":
    key = jax.random.PRNGKey(0)
    k_x, k_e, k_p = jax.random.split(key, 3)

    # Modest graph: 600 nodes (ragged vs. tile size), 160 features (not a
    # multiple of 128), 1024 edges.  tm=128 forces several grid steps so the
    # multi-tile + padded-tail paths are exercised.
    n_nodes, feat_dim, n_edges = 600, 160, 1024

    x = jax.random.normal(k_x, (n_nodes, feat_dim), dtype=jnp.float32)
    edge_index = jax.random.randint(k_e, (2, n_edges), 0, n_nodes, dtype=jnp.int32)
    perm = jax.random.permutation(k_p, n_nodes).astype(jnp.int32)

    # Force the Pallas DMA-gather path (auto-dispatch would send this small
    # example to the XLA fast path per the tiny-input guidance).
    shuf_x, ei_out = feature_shuffle(x, edge_index, perm, use_pallas=True, tm=128)
    jax.block_until_ready(shuf_x)
    jax.block_until_ready(ei_out)

    ref = x[perm, :]
    assert shuf_x.shape == x.shape and shuf_x.dtype == x.dtype
    # DMA gather is a byte copy: results are bit-exact.
    assert jnp.array_equal(shuf_x, ref), "row gather mismatch"
    assert jnp.array_equal(ei_out, edge_index), "edge_index must pass through"

    # Same kernel with the auto-picked tile size (single large tile).
    shuf_x2, _ = feature_shuffle(x, edge_index, perm, use_pallas=True)
    jax.block_until_ready(shuf_x2)
    assert jnp.array_equal(shuf_x2, ref), "auto-tile gather mismatch"

    # Tiny graph (16 x 32) goes through the XLA fast path of the same wrapper.
    x_s = jax.random.normal(k_x, (16, 32), dtype=jnp.float32)
    ei_s = jax.random.randint(k_e, (2, 24), 0, 16, dtype=jnp.int32)
    perm_s = jax.random.permutation(k_p, 16).astype(jnp.int32)
    shuf_s, ei_s_out = feature_shuffle(x_s, ei_s, perm_s)
    jax.block_until_ready(shuf_s)
    assert jnp.array_equal(shuf_s, x_s[perm_s, :])
    assert jnp.array_equal(ei_s_out, ei_s)

    print("KERNEL_OK")
</pallas_src>

<mosaic_0001>
module attributes {stable_mosaic.version = 11 : i64} {
  func.func @_gather_kernel(%arg0: i32, %arg1: memref<640xi32, #tpu.memory_space<smem>>, %arg2: memref<600x160xf32, #tpu.memory_space<any>>, %arg3: memref<128x160xf32, #tpu.memory_space<vmem>>, %arg4: memref<16x!tpu.dma_semaphore, #tpu.memory_space<semaphore_mem>>) attributes {dimension_semantics = [#tpu.dimension_semantics<parallel>], iteration_bounds = array<i64: 5>, scalar_prefetch = 1 : i64, scratch_operands = 1 : i64, tpu.core_type = #tpu.core_type<tc>, window_params = [{}, {transform_indices = @transform_1, window_bounds = array<i64: 128, 160>}]} {
    %c128_i32 = arith.constant 128 : i32
    %0 = arith.muli %arg0, %c128_i32 : i32
    %c0_i32 = arith.constant 0 : i32
    %1 = arith.addi %0, %c0_i32 : i32
    %2 = arith.index_cast %1 : i32 to index
    %3 = memref.load %arg1[%2] : memref<640xi32, #tpu.memory_space<smem>>
    %c0_i32_0 = arith.constant 0 : i32
    %c0_i32_1 = arith.constant 0 : i32
    %c0_i32_2 = arith.constant 0 : i32
    %4 = tpu.memref_slice %arg2[%3, %c0_i32_2] : memref<600x160xf32, #tpu.memory_space<any>> -> memref<1x160xf32, #tpu.memory_space<any>>
    %5 = tpu.memref_squeeze %4 : memref<1x160xf32, #tpu.memory_space<any>> -> memref<160xf32, #tpu.memory_space<any>>
    %c0_i32_3 = arith.constant 0 : i32
    %6 = tpu.memref_slice %arg3[%c0_i32_0, %c0_i32_3] : memref<128x160xf32, #tpu.memory_space<vmem>> -> memref<1x160xf32, #tpu.memory_space<vmem>>
    %7 = tpu.memref_squeeze %6 : memref<1x160xf32, #tpu.memory_space<vmem>> -> memref<160xf32, #tpu.memory_space<vmem>>
    %8 = tpu.memref_slice %arg4[%c0_i32_1] : memref<16x!tpu.dma_semaphore, #tpu.memory_space<semaphore_mem>> -> memref<1x!tpu.dma_semaphore, #tpu.memory_space<semaphore_mem>>
    %9 = tpu.memref_squeeze %8 : memref<1x!tpu.dma_semaphore, #tpu.memory_space<semaphore_mem>> -> memref<!tpu.dma_semaphore, #tpu.memory_space<semaphore_mem>>
    tpu.enqueue_dma source(%5 : memref<160xf32, #tpu.memory_space<any>>) target(%7 : memref<160xf32, #tpu.memory_space<vmem>>) target_semaphore(%9 : memref<!tpu.dma_semaphore, #tpu.memory_space<semaphore_mem>>)
    %c1_i32 = arith.constant 1 : i32
    %10 = arith.addi %0, %c1_i32 : i32
    %11 = arith.index_cast %10 : i32 to index
    %12 = memref.load %arg1[%11] : memref<640xi32, #tpu.memory_space<smem>>
    %c1_i32_4 = arith.constant 1 : i32
    %c1_i32_5 = arith.constant 1 : i32
    %c0_i32_6 = arith.constant 0 : i32
    %13 = tpu.memref_slice %arg2[%12, %c0_i32_6] : memref<600x160xf32, #tpu.memory_space<any>> -> memref<1x160xf32, #tpu.memory_space<any>>
    %14 = tpu.memref_squeeze %13 : memref<1x160xf32, #tpu.memory_space<any>> -> memref<160xf32, #tpu.memory_space<any>>
    %c0_i32_7 = arith.constant 0 : i32
    %15 = tpu.memref_slice %arg3[%c1_i32_4, %c0_i32_7] : memref<128x160xf32, #tpu.memory_space<vmem>> -> memref<1x160xf32, #tpu.memory_space<vmem>>
    %16 = tpu.memref_squeeze %15 : memref<1x160xf32, #tpu.memory_space<vmem>> -> memref<160xf32, #tpu.memory_space<vmem>>
    %17 = tpu.memref_slice %arg4[%c1_i32_5] : memref<16x!tpu.dma_semaphore, #tpu.memory_space<semaphore_mem>> -> memref<1x!tpu.dma_semaphore, #tpu.memory_space<semaphore_mem>>
    %18 = tpu.memref_squeeze %17 : memref<1x!tpu.dma_semaphore, #tpu.memory_space<semaphore_mem>> -> memref<!tpu.dma_semaphore, #tpu.memory_space<semaphore_mem>>
    tpu.enqueue_dma source(%14 : memref<160xf32, #tpu.memory_space<any>>) target(%16 : memref<160xf32, #tpu.memory_space<vmem>>) target_semaphore(%18 : memref<!tpu.dma_semaphore, #tpu.memory_space<semaphore_mem>>)
    %c2_i32 = arith.constant 2 : i32
    %19 = arith.addi %0, %c2_i32 : i32
    %20 = arith.index_cast %19 : i32 to index
    %21 = memref.load %arg1[%20] : memref<640xi32, #tpu.memory_space<smem>>
    %c2_i32_8 = arith.constant 2 : i32
    %c2_i32_9 = arith.constant 2 : i32
    %c0_i32_10 = arith.constant 0 : i32
    %22 = tpu.memref_slice %arg2[%21, %c0_i32_10] : memref<600x160xf32, #tpu.memory_space<any>> -> memref<1x160xf32, #tpu.memory_space<any>>
    %23 = tpu.memref_squeeze %22 : memref<1x160xf32, #tpu.memory_space<any>> -> memref<160xf32, #tpu.memory_space<any>>
    %c0_i32_11 = arith.constant 0 : i32
    %24 = tpu.memref_slice %arg3[%c2_i32_8, %c0_i32_11] : memref<128x160xf32, #tpu.memory_space<vmem>> -> memref<1x160xf32, #tpu.memory_space<vmem>>
    %25 = tpu.memref_squeeze %24 : memref<1x160xf32, #tpu.memory_space<vmem>> -> memref<160xf32, #tpu.memory_space<vmem>>
    %26 = tpu.memref_slice %arg4[%c2_i32_9] : memref<16x!tpu.dma_semaphore, #tpu.memory_space<semaphore_mem>> -> memref<1x!tpu.dma_semaphore, #tpu.memory_space<semaphore_mem>>
    %27 = tpu.memref_squeeze %26 : memref<1x!tpu.dma_semaphore, #tpu.memory_space<semaphore_mem>> -> memref<!tpu.dma_semaphore, #tpu.memory_space<semaphore_mem>>
    tpu.enqueue_dma source(%23 : memref<160xf32, #tpu.memory_space<any>>) target(%25 : memref<160xf32, #tpu.memory_space<vmem>>) target_semaphore(%27 : memref<!tpu.dma_semaphore, #tpu.memory_space<semaphore_mem>>)
    %c3_i32 = arith.constant 3 : i32
    %28 = arith.addi %0, %c3_i32 : i32
    %29 = arith.index_cast %28 : i32 to index
    %30 = memref.load %arg1[%29] : memref<640xi32, #tpu.memory_space<smem>>
    %c3_i32_12 = arith.constant 3 : i32
    %c3_i32_13 = arith.constant 3 : i32
    %c0_i32_14 = arith.constant 0 : i32
    %31 = tpu.memref_slice %arg2[%30, %c0_i32_14] : memref<600x160xf32, #tpu.memory_space<any>> -> memref<1x160xf32, #tpu.memory_space<any>>
    %32 = tpu.memref_squeeze %31 : memref<1x160xf32, #tpu.memory_space<any>> -> memref<160xf32, #tpu.memory_space<any>>
    %c0_i32_15 = arith.constant 0 : i32
    %33 = tpu.memref_slice %arg3[%c3_i32_12, %c0_i32_15] : memref<128x160xf32, #tpu.memory_space<vmem>> -> memref<1x160xf32, #tpu.memory_space<vmem>>
    %34 = tpu.memref_squeeze %33 : memref<1x160xf32, #tpu.memory_space<vmem>> -> memref<160xf32, #tpu.memory_space<vmem>>
    %35 = tpu.memref_slice %arg4[%c3_i32_13] : memref<16x!tpu.dma_semaphore, #tpu.memory_space<semaphore_mem>> -> memref<1x!tpu.dma_semaphore, #tpu.memory_space<semaphore_mem>>
    %36 = tpu.memref_squeeze %35 : memref<1x!tpu.dma_semaphore, #tpu.memory_space<semaphore_mem>> -> memref<!tpu.dma_semaphore, #tpu.memory_space<semaphore_mem>>
    tpu.enqueue_dma source(%32 : memref<160xf32, #tpu.memory_space<any>>) target(%34 : memref<160xf32, #tpu.memory_space<vmem>>) target_semaphore(%36 : memref<!tpu.dma_semaphore, #tpu.memory_space<semaphore_mem>>)
    %c4_i32 = arith.constant 4 : i32
    %37 = arith.addi %0, %c4_i32 : i32
    %38 = arith.index_cast %37 : i32 to index
    %39 = memref.load %arg1[%38] : memref<640xi32, #tpu.memory_space<smem>>
    %c4_i32_16 = arith.constant 4 : i32
    %c4_i32_17 = arith.constant 4 : i32
    %c0_i32_18 = arith.constant 0 : i32
    %40 = tpu.memref_slice %arg2[%39, %c0_i32_18] : memref<600x160xf32, #tpu.memory_space<any>> -> memref<1x160xf32, #tpu.memory_space<any>>
    %41 = tpu.memref_squeeze %40 : memref<1x160xf32, #tpu.memory_space<any>> -> memref<160xf32, #tpu.memory_space<any>>
    %c0_i32_19 = arith.constant 0 : i32
    %42 = tpu.memref_slice %arg3[%c4_i32_16, %c0_i32_19] : memref<128x160xf32, #tpu.memory_space<vmem>> -> memref<1x160xf32, #tpu.memory_space<vmem>>
    %43 = tpu.memref_squeeze %42 : memref<1x160xf32, #tpu.memory_space<vmem>> -> memref<160xf32, #tpu.memory_space<vmem>>
    %44 = tpu.memref_slice %arg4[%c4_i32_17] : memref<16x!tpu.dma_semaphore, #tpu.memory_space<semaphore_mem>> -> memref<1x!tpu.dma_semaphore, #tpu.memory_space<semaphore_mem>>
    %45 = tpu.memref_squeeze %44 : memref<1x!tpu.dma_semaphore, #tpu.memory_space<semaphore_mem>> -> memref<!tpu.dma_semaphore, #tpu.memory_space<semaphore_mem>>
    tpu.enqueue_dma source(%41 : memref<160xf32, #tpu.memory_space<any>>) target(%43 : memref<160xf32, #tpu.memory_space<vmem>>) target_semaphore(%45 : memref<!tpu.dma_semaphore, #tpu.memory_space<semaphore_mem>>)
    %c5_i32 = arith.constant 5 : i32
    %46 = arith.addi %0, %c5_i32 : i32
    %47 = arith.index_cast %46 : i32 to index
    %48 = memref.load %arg1[%47] : memref<640xi32, #tpu.memory_space<smem>>
    %c5_i32_20 = arith.constant 5 : i32
    %c5_i32_21 = arith.constant 5 : i32
    %c0_i32_22 = arith.constant 0 : i32
    %49 = tpu.memref_slice %arg2[%48, %c0_i32_22] : memref<600x160xf32, #tpu.memory_space<any>> -> memref<1x160xf32, #tpu.memory_space<any>>
    %50 = tpu.memref_squeeze %49 : memref<1x160xf32, #tpu.memory_space<any>> -> memref<160xf32, #tpu.memory_space<any>>
    %c0_i32_23 = arith.constant 0 : i32
    %51 = tpu.memref_slice %arg3[%c5_i32_20, %c0_i32_23] : memref<128x160xf32, #tpu.memory_space<vmem>> -> memref<1x160xf32, #tpu.memory_space<vmem>>
    %52 = tpu.memref_squeeze %51 : memref<1x160xf32, #tpu.memory_space<vmem>> -> memref<160xf32, #tpu.memory_space<vmem>>
    %53 = tpu.memref_slice %arg4[%c5_i32_21] : memref<16x!tpu.dma_semaphore, #tpu.memory_space<semaphore_mem>> -> memref<1x!tpu.dma_semaphore, #tpu.memory_space<semaphore_mem>>
    %54 = tpu.memref_squeeze %53 : memref<1x!tpu.dma_semaphore, #tpu.memory_space<semaphore_mem>> -> memref<!tpu.dma_semaphore, #tpu.memory_space<semaphore_mem>>
    tpu.enqueue_dma source(%50 : memref<160xf32, #tpu.memory_space<any>>) target(%52 : memref<160xf32, #tpu.memory_space<vmem>>) target_semaphore(%54 : memref<!tpu.dma_semaphore, #tpu.memory_space<semaphore_mem>>)
    %c6_i32 = arith.constant 6 : i32
    %55 = arith.addi %0, %c6_i32 : i32
    %56 = arith.index_cast %55 : i32 to index
    %57 = memref.load %arg1[%56] : memref<640xi32, #tpu.memory_space<smem>>
    %c6_i32_24 = arith.constant 6 : i32
    %c6_i32_25 = arith.constant 6 : i32
    %c0_i32_26 = arith.constant 0 : i32
    %58 = tpu.memref_slice %arg2[%57, %c0_i32_26] : memref<600x160xf32, #tpu.memory_space<any>> -> memref<1x160xf32, #tpu.memory_space<any>>
    %59 = tpu.memref_squeeze %58 : memref<1x160xf32, #tpu.memory_space<any>> -> memref<160xf32, #tpu.memory_space<any>>
    %c0_i32_27 = arith.constant 0 : i32
    %60 = tpu.memref_slice %arg3[%c6_i32_24, %c0_i32_27] : memref<128x160xf32, #tpu.memory_space<vmem>> -> memref<1x160xf32, #tpu.memory_space<vmem>>
    %61 = tpu.memref_squeeze %60 : memref<1x160xf32, #tpu.memory_space<vmem>> -> memref<160xf32, #tpu.memory_space<vmem>>
    %62 = tpu.memref_slice %arg4[%c6_i32_25] : memref<16x!tpu.dma_semaphore, #tpu.memory_space<semaphore_mem>> -> memref<1x!tpu.dma_semaphore, #tpu.memory_space<semaphore_mem>>
    %63 = tpu.memref_squeeze %62 : memref<1x!tpu.dma_semaphore, #tpu.memory_space<semaphore_mem>> -> memref<!tpu.dma_semaphore, #tpu.memory_space<semaphore_mem>>
    tpu.enqueue_dma source(%59 : memref<160xf32, #tpu.memory_space<any>>) target(%61 : memref<160xf32, #tpu.memory_space<vmem>>) target_semaphore(%63 : memref<!tpu.dma_semaphore, #tpu.memory_space<semaphore_mem>>)
    %c7_i32 = arith.constant 7 : i32
    %64 = arith.addi %0, %c7_i32 : i32
    %65 = arith.index_cast %64 : i32 to index
    %66 = memref.load %arg1[%65] : memref<640xi32, #tpu.memory_space<smem>>
    %c7_i32_28 = arith.constant 7 : i32
    %c7_i32_29 = arith.constant 7 : i32
    %c0_i32_30 = arith.constant 0 : i32
    %67 = tpu.memref_slice %arg2[%66, %c0_i32_30] : memref<600x160xf32, #tpu.memory_space<any>> -> memref<1x160xf32, #tpu.memory_space<any>>
    %68 = tpu.memref_squeeze %67 : memref<1x160xf32, #tpu.memory_space<any>> -> memref<160xf32, #tpu.memory_space<any>>
    %c0_i32_31 = arith.constant 0 : i32
    %69 = tpu.memref_slice %arg3[%c7_i32_28, %c0_i32_31] : memref<128x160xf32, #tpu.memory_space<vmem>> -> memref<1x160xf32, #tpu.memory_space<vmem>>
    %70 = tpu.memref_squeeze %69 : memref<1x160xf32, #tpu.memory_space<vmem>> -> memref<160xf32, #tpu.memory_space<vmem>>
    %71 = tpu.memref_slice %arg4[%c7_i32_29] : memref<16x!tpu.dma_semaphore, #tpu.memory_space<semaphore_mem>> -> memref<1x!tpu.dma_semaphore, #tpu.memory_space<semaphore_mem>>
    %72 = tpu.memref_squeeze %71 : memref<1x!tpu.dma_semaphore, #tpu.memory_space<semaphore_mem>> -> memref<!tpu.dma_semaphore, #tpu.memory_space<semaphore_mem>>
    tpu.enqueue_dma source(%68 : memref<160xf32, #tpu.memory_space<any>>) target(%70 : memref<160xf32, #tpu.memory_space<vmem>>) target_semaphore(%72 : memref<!tpu.dma_semaphore, #tpu.memory_space<semaphore_mem>>)
    %c8_i32 = arith.constant 8 : i32
    %73 = arith.addi %0, %c8_i32 : i32
    %74 = arith.index_cast %73 : i32 to index
    %75 = memref.load %arg1[%74] : memref<640xi32, #tpu.memory_space<smem>>
    %c8_i32_32 = arith.constant 8 : i32
    %c8_i32_33 = arith.constant 8 : i32
    %c0_i32_34 = arith.constant 0 : i32
    %76 = tpu.memref_slice %arg2[%75, %c0_i32_34] : memref<600x160xf32, #tpu.memory_space<any>> -> memref<1x160xf32, #tpu.memory_space<any>>
    %77 = tpu.memref_squeeze %76 : memref<1x160xf32, #tpu.memory_space<any>> -> memref<160xf32, #tpu.memory_space<any>>
    %c0_i32_35 = arith.constant 0 : i32
    %78 = tpu.memref_slice %arg3[%c8_i32_32, %c0_i32_35] : memref<128x160xf32, #tpu.memory_space<vmem>> -> memref<1x160xf32, #tpu.memory_space<vmem>>
    %79 = tpu.memref_squeeze %78 : memref<1x160xf32, #tpu.memory_space<vmem>> -> memref<160xf32, #tpu.memory_space<vmem>>
    %80 = tpu.memref_slice %arg4[%c8_i32_33] : memref<16x!tpu.dma_semaphore, #tpu.memory_space<semaphore_mem>> -> memref<1x!tpu.dma_semaphore, #tpu.memory_space<semaphore_mem>>
    %81 = tpu.memref_squeeze %80 : memref<1x!tpu.dma_semaphore, #tpu.memory_space<semaphore_mem>> -> memref<!tpu.dma_semaphore, #tpu.memory_space<semaphore_mem>>
    tpu.enqueue_dma source(%77 : memref<160xf32, #tpu.memory_space<any>>) target(%79 : memref<160xf32, #tpu.memory_space<vmem>>) target_semaphore(%81 : memref<!tpu.dma_semaphore, #tpu.memory_space<semaphore_mem>>)
    %c9_i32 = arith.constant 9 : i32
    %82 = arith.addi %0, %c9_i32 : i32
    %83 = arith.index_cast %82 : i32 to index
    %84 = memref.load %arg1[%83] : memref<640xi32, #tpu.memory_space<smem>>
    %c9_i32_36 = arith.constant 9 : i32
    %c9_i32_37 = arith.constant 9 : i32
    %c0_i32_38 = arith.constant 0 : i32
    %85 = tpu.memref_slice %arg2[%84, %c0_i32_38] : memref<600x160xf32, #tpu.memory_space<any>> -> memref<1x160xf32, #tpu.memory_space<any>>
    %86 = tpu.memref_squeeze %85 : memref<1x160xf32, #tpu.memory_space<any>> -> memref<160xf32, #tpu.memory_space<any>>
    %c0_i32_39 = arith.constant 0 : i32
    %87 = tpu.memref_slice %arg3[%c9_i32_36, %c0_i32_39] : memref<128x160xf32, #tpu.memory_space<vmem>> -> memref<1x160xf32, #tpu.memory_space<vmem>>
    %88 = tpu.memref_squeeze %87 : memref<1x160xf32, #tpu.memory_space<vmem>> -> memref<160xf32, #tpu.memory_space<vmem>>
    %89 = tpu.memref_slice %arg4[%c9_i32_37] : memref<16x!tpu.dma_semaphore, #tpu.memory_space<semaphore_mem>> -> memref<1x!tpu.dma_semaphore, #tpu.memory_space<semaphore_mem>>
    %90 = tpu.memref_squeeze %89 : memref<1x!tpu.dma_semaphore, #tpu.memory_space<semaphore_mem>> -> memref<!tpu.dma_semaphore, #tpu.memory_space<semaphore_mem>>
    tpu.enqueue_dma source(%86 : memref<160xf32, #tpu.memory_space<any>>) target(%88 : memref<160xf32, #tpu.memory_space<vmem>>) target_semaphore(%90 : memref<!tpu.dma_semaphore, #tpu.memory_space<semaphore_mem>>)
    %c10_i32 = arith.constant 10 : i32
    %91 = arith.addi %0, %c10_i32 : i32
    %92 = arith.index_cast %91 : i32 to index
    %93 = memref.load %arg1[%92] : memref<640xi32, #tpu.memory_space<smem>>
    %c10_i32_40 = arith.constant 10 : i32
    %c10_i32_41 = arith.constant 10 : i32
    %c0_i32_42 = arith.constant 0 : i32
    %94 = tpu.memref_slice %arg2[%93, %c0_i32_42] : memref<600x160xf32, #tpu.memory_space<any>> -> memref<1x160xf32, #tpu.memory_space<any>>
    %95 = tpu.memref_squeeze %94 : memref<1x160xf32, #tpu.memory_space<any>> -> memref<160xf32, #tpu.memory_space<any>>
    %c0_i32_43 = arith.constant 0 : i32
    %96 = tpu.memref_slice %arg3[%c10_i32_40, %c0_i32_43] : memref<128x160xf32, #tpu.memory_space<vmem>> -> memref<1x160xf32, #tpu.memory_space<vmem>>
    %97 = tpu.memref_squeeze %96 : memref<1x160xf32, #tpu.memory_space<vmem>> -> memref<160xf32, #tpu.memory_space<vmem>>
    %98 = tpu.memref_slice %arg4[%c10_i32_41] : memref<16x!tpu.dma_semaphore, #tpu.memory_space<semaphore_mem>> -> memref<1x!tpu.dma_semaphore, #tpu.memory_space<semaphore_mem>>
    %99 = tpu.memref_squeeze %98 : memref<1x!tpu.dma_semaphore, #tpu.memory_space<semaphore_mem>> -> memref<!tpu.dma_semaphore, #tpu.memory_space<semaphore_mem>>
    tpu.enqueue_dma source(%95 : memref<160xf32, #tpu.memory_space<any>>) target(%97 : memref<160xf32, #tpu.memory_space<vmem>>) target_semaphore(%99 : memref<!tpu.dma_semaphore, #tpu.memory_space<semaphore_mem>>)
    %c11_i32 = arith.constant 11 : i32
    %100 = arith.addi %0, %c11_i32 : i32
    %101 = arith.index_cast %100 : i32 to index
    %102 = memref.load %arg1[%101] : memref<640xi32, #tpu.memory_space<smem>>
    %c11_i32_44 = arith.constant 11 : i32
    %c11_i32_45 = arith.constant 11 : i32
    %c0_i32_46 = arith.constant 0 : i32
    %103 = tpu.memref_slice %arg2[%102, %c0_i32_46] : memref<600x160xf32, #tpu.memory_space<any>> -> memref<1x160xf32, #tpu.memory_space<any>>
    %104 = tpu.memref_squeeze %103 : memref<1x160xf32, #tpu.memory_space<any>> -> memref<160xf32, #tpu.memory_space<any>>
    %c0_i32_47 = arith.constant 0 : i32
    %105 = tpu.memref_slice %arg3[%c11_i32_44, %c0_i32_47] : memref<128x160xf32, #tpu.memory_space<vmem>> -> memref<1x160xf32, #tpu.memory_space<vmem>>
    %106 = tpu.memref_squeeze %105 : memref<1x160xf32, #tpu.memory_space<vmem>> -> memref<160xf32, #tpu.memory_space<vmem>>
    %107 = tpu.memref_slice %arg4[%c11_i32_45] : memref<16x!tpu.dma_semaphore, #tpu.memory_space<semaphore_mem>> -> memref<1x!tpu.dma_semaphore, #tpu.memory_space<semaphore_mem>>
    %108 = tpu.memref_squeeze %107 : memref<1x!tpu.dma_semaphore, #tpu.memory_space<semaphore_mem>> -> memref<!tpu.dma_semaphore, #tpu.memory_space<semaphore_mem>>
    tpu.enqueue_dma source(%104 : memref<160xf32, #tpu.memory_space<any>>) target(%106 : memref<160xf32, #tpu.memory_space<vmem>>) target_semaphore(%108 : memref<!tpu.dma_semaphore, #tpu.memory_space<semaphore_mem>>)
    %c12_i32 = arith.constant 12 : i32
    %109 = arith.addi %0, %c12_i32 : i32
    %110 = arith.index_cast %109 : i32 to index
    %111 = memref.load %arg1[%110] : memref<640xi32, #tpu.memory_space<smem>>
    %c12_i32_48 = arith.constant 12 : i32
    %c12_i32_49 = arith.constant 12 : i32
    %c0_i32_50 = arith.constant 0 : i32
    %112 = tpu.memref_slice %arg2[%111, %c0_i32_50] : memref<600x160xf32, #tpu.memory_space<any>> -> memref<1x160xf32, #tpu.memory_space<any>>
    %113 = tpu.memref_squeeze %112 : memref<1x160xf32, #tpu.memory_space<any>> -> memref<160xf32, #tpu.memory_space<any>>
    %c0_i32_51 = arith.constant 0 : i32
    %114 = tpu.memref_slice %arg3[%c12_i32_48, %c0_i32_51] : memref<128x160xf32, #tpu.memory_space<vmem>> -> memref<1x160xf32, #tpu.memory_space<vmem>>
    %115 = tpu.memref_squeeze %114 : memref<1x160xf32, #tpu.memory_space<vmem>> -> memref<160xf32, #tpu.memory_space<vmem>>
    %116 = tpu.memref_slice %arg4[%c12_i32_49] : memref<16x!tpu.dma_semaphore, #tpu.memory_space<semaphore_mem>> -> memref<1x!tpu.dma_semaphore, #tpu.memory_space<semaphore_mem>>
    %117 = tpu.memref_squeeze %116 : memref<1x!tpu.dma_semaphore, #tpu.memory_space<semaphore_mem>> -> memref<!tpu.dma_semaphore, #tpu.memory_space<semaphore_mem>>
    tpu.enqueue_dma source(%113 : memref<160xf32, #tpu.memory_space<any>>) target(%115 : memref<160xf32, #tpu.memory_space<vmem>>) target_semaphore(%117 : memref<!tpu.dma_semaphore, #tpu.memory_space<semaphore_mem>>)
    %c13_i32 = arith.constant 13 : i32
    %118 = arith.addi %0, %c13_i32 : i32
    %119 = arith.index_cast %118 : i32 to index
    %120 = memref.load %arg1[%119] : memref<640xi32, #tpu.memory_space<smem>>
    %c13_i32_52 = arith.constant 13 : i32
    %c13_i32_53 = arith.constant 13 : i32
    %c0_i32_54 = arith.constant 0 : i32
    %121 = tpu.memref_slice %arg2[%120, %c0_i32_54] : memref<600x160xf32, #tpu.memory_space<any>> -> memref<1x160xf32, #tpu.memory_space<any>>
    %122 = tpu.memref_squeeze %121 : memref<1x160xf32, #tpu.memory_space<any>> -> memref<160xf32, #tpu.memory_space<any>>
    %c0_i32_55 = arith.constant 0 : i32
    %123 = tpu.memref_slice %arg3[%c13_i32_52, %c0_i32_55] : memref<128x160xf32, #tpu.memory_space<vmem>> -> memref<1x160xf32, #tpu.memory_space<vmem>>
    %124 = tpu.memref_squeeze %123 : memref<1x160xf32, #tpu.memory_space<vmem>> -> memref<160xf32, #tpu.memory_space<vmem>>
    %125 = tpu.memref_slice %arg4[%c13_i32_53] : memref<16x!tpu.dma_semaphore, #tpu.memory_space<semaphore_mem>> -> memref<1x!tpu.dma_semaphore, #tpu.memory_space<semaphore_mem>>
    %126 = tpu.memref_squeeze %125 : memref<1x!tpu.dma_semaphore, #tpu.memory_space<semaphore_mem>> -> memref<!tpu.dma_semaphore, #tpu.memory_space<semaphore_mem>>
    tpu.enqueue_dma source(%122 : memref<160xf32, #tpu.memory_space<any>>) target(%124 : memref<160xf32, #tpu.memory_space<vmem>>) target_semaphore(%126 : memref<!tpu.dma_semaphore, #tpu.memory_space<semaphore_mem>>)
    %c14_i32 = arith.constant 14 : i32
    %127 = arith.addi %0, %c14_i32 : i32
    %128 = arith.index_cast %127 : i32 to index
    %129 = memref.load %arg1[%128] : memref<640xi32, #tpu.memory_space<smem>>
    %c14_i32_56 = arith.constant 14 : i32
    %c14_i32_57 = arith.constant 14 : i32
    %c0_i32_58 = arith.constant 0 : i32
    %130 = tpu.memref_slice %arg2[%129, %c0_i32_58] : memref<600x160xf32, #tpu.memory_space<any>> -> memref<1x160xf32, #tpu.memory_space<any>>
    %131 = tpu.memref_squeeze %130 : memref<1x160xf32, #tpu.memory_space<any>> -> memref<160xf32, #tpu.memory_space<any>>
    %c0_i32_59 = arith.constant 0 : i32
    %132 = tpu.memref_slice %arg3[%c14_i32_56, %c0_i32_59] : memref<128x160xf32, #tpu.memory_space<vmem>> -> memref<1x160xf32, #tpu.memory_space<vmem>>
    %133 = tpu.memref_squeeze %132 : memref<1x160xf32, #tpu.memory_space<vmem>> -> memref<160xf32, #tpu.memory_space<vmem>>
    %134 = tpu.memref_slice %arg4[%c14_i32_57] : memref<16x!tpu.dma_semaphore, #tpu.memory_space<semaphore_mem>> -> memref<1x!tpu.dma_semaphore, #tpu.memory_space<semaphore_mem>>
    %135 = tpu.memref_squeeze %134 : memref<1x!tpu.dma_semaphore, #tpu.memory_space<semaphore_mem>> -> memref<!tpu.dma_semaphore, #tpu.memory_space<semaphore_mem>>
    tpu.enqueue_dma source(%131 : memref<160xf32, #tpu.memory_space<any>>) target(%133 : memref<160xf32, #tpu.memory_space<vmem>>) target_semaphore(%135 : memref<!tpu.dma_semaphore, #tpu.memory_space<semaphore_mem>>)
    %c15_i32 = arith.constant 15 : i32
    %136 = arith.addi %0, %c15_i32 : i32
    %137 = arith.index_cast %136 : i32 to index
    %138 = memref.load %arg1[%137] : memref<640xi32, #tpu.memory_space<smem>>
    %c15_i32_60 = arith.constant 15 : i32
    %c15_i32_61 = arith.constant 15 : i32
    %c0_i32_62 = arith.constant 0 : i32
    %139 = tpu.memref_slice %arg2[%138, %c0_i32_62] : memref<600x160xf32, #tpu.memory_space<any>> -> memref<1x160xf32, #tpu.memory_space<any>>
    %140 = tpu.memref_squeeze %139 : memref<1x160xf32, #tpu.memory_space<any>> -> memref<160xf32, #tpu.memory_space<any>>
    %c0_i32_63 = arith.constant 0 : i32
    %141 = tpu.memref_slice %arg3[%c15_i32_60, %c0_i32_63] : memref<128x160xf32, #tpu.memory_space<vmem>> -> memref<1x160xf32, #tpu.memory_space<vmem>>
    %142 = tpu.memref_squeeze %141 : memref<1x160xf32, #tpu.memory_space<vmem>> -> memref<160xf32, #tpu.memory_space<vmem>>
    %143 = tpu.memref_slice %arg4[%c15_i32_61] : memref<16x!tpu.dma_semaphore, #tpu.memory_space<semaphore_mem>> -> memref<1x!tpu.dma_semaphore, #tpu.memory_space<semaphore_mem>>
    %144 = tpu.memref_squeeze %143 : memref<1x!tpu.dma_semaphore, #tpu.memory_space<semaphore_mem>> -> memref<!tpu.dma_semaphore, #tpu.memory_space<semaphore_mem>>
    tpu.enqueue_dma source(%140 : memref<160xf32, #tpu.memory_space<any>>) target(%142 : memref<160xf32, #tpu.memory_space<vmem>>) target_semaphore(%144 : memref<!tpu.dma_semaphore, #tpu.memory_space<semaphore_mem>>)
    %c0_i32_64 = arith.constant 0 : i32
    %c112_i32 = arith.constant 112 : i32
    %145 = arith.addi %c0_i32_64, %c112_i32 : i32
    %c1_i32_65 = arith.constant 1 : i32
    scf.for %arg5 = %c0_i32_64 to %145 step %c1_i32_65  : i32 {
      %c16_i32 = arith.constant 16 : i32
      %c0_i32_132 = arith.constant 0 : i32
      %242 = arith.cmpi eq, %c16_i32, %c0_i32_132 : i32
      %c1_i32_133 = arith.constant 1 : i32
      %243 = arith.select %242, %c1_i32_133, %c16_i32 : i32
      %244 = arith.remsi %arg5, %243 : i32
      %c0_i32_134 = arith.constant 0 : i32
      %245 = arith.cmpi ne, %244, %c0_i32_134 : i32
      %c0_i32_135 = arith.constant 0 : i32
      %246 = arith.cmpi slt, %244, %c0_i32_135 : i32
      %c0_i32_136 = arith.constant 0 : i32
      %247 = arith.cmpi slt, %243, %c0_i32_136 : i32
      %248 = arith.xori %246, %247 : i1
      %249 = arith.andi %248, %245 : i1
      %250 = arith.addi %244, %243 : i32
      %251 = arith.select %249, %250, %244 : i32
      %c0_i32_137 = arith.constant 0 : i32
      %c0_i32_138 = arith.constant 0 : i32
      %252 = tpu.memref_slice %arg2[%c0_i32_137, %c0_i32_138] : memref<600x160xf32, #tpu.memory_space<any>> -> memref<1x160xf32, #tpu.memory_space<any>>
      %253 = tpu.memref_squeeze %252 : memref<1x160xf32, #tpu.memory_space<any>> -> memref<160xf32, #tpu.memory_space<any>>
      %c0_i32_139 = arith.constant 0 : i32
      %254 = tpu.memref_slice %arg3[%arg5, %c0_i32_139] : memref<128x160xf32, #tpu.memory_space<vmem>> -> memref<1x160xf32, #tpu.memory_space<vmem>>
      %255 = tpu.memref_squeeze %254 : memref<1x160xf32, #tpu.memory_space<vmem>> -> memref<160xf32, #tpu.memory_space<vmem>>
      %256 = tpu.memref_slice %arg4[%251] : memref<16x!tpu.dma_semaphore, #tpu.memory_space<semaphore_mem>> -> memref<1x!tpu.dma_semaphore, #tpu.memory_space<semaphore_mem>>
      %257 = tpu.memref_squeeze %256 : memref<1x!tpu.dma_semaphore, #tpu.memory_space<semaphore_mem>> -> memref<!tpu.dma_semaphore, #tpu.memory_space<semaphore_mem>>
      tpu.wait_dma2 semaphore(%257 : memref<!tpu.dma_semaphore, #tpu.memory_space<semaphore_mem>>) src(%253 : memref<160xf32, #tpu.memory_space<any>>) dst(%255 : memref<160xf32, #tpu.memory_space<vmem>>)
      %c16_i32_140 = arith.constant 16 : i32
      %258 = arith.addi %arg5, %c16_i32_140 : i32
      %259 = arith.addi %0, %258 : i32
      %260 = arith.index_cast %259 : i32 to index
      %261 = memref.load %arg1[%260] : memref<640xi32, #tpu.memory_space<smem>>
      %c0_i32_141 = arith.constant 0 : i32
      %262 = tpu.memref_slice %arg2[%261, %c0_i32_141] : memref<600x160xf32, #tpu.memory_space<any>> -> memref<1x160xf32, #tpu.memory_space<any>>
      %263 = tpu.memref_squeeze %262 : memref<1x160xf32, #tpu.memory_space<any>> -> memref<160xf32, #tpu.memory_space<any>>
      %c0_i32_142 = arith.constant 0 : i32
      %264 = tpu.memref_slice %arg3[%258, %c0_i32_142] : memref<128x160xf32, #tpu.memory_space<vmem>> -> memref<1x160xf32, #tpu.memory_space<vmem>>
      %265 = tpu.memref_squeeze %264 : memref<1x160xf32, #tpu.memory_space<vmem>> -> memref<160xf32, #tpu.memory_space<vmem>>
      %266 = tpu.memref_slice %arg4[%251] : memref<16x!tpu.dma_semaphore, #tpu.memory_space<semaphore_mem>> -> memref<1x!tpu.dma_semaphore, #tpu.memory_space<semaphore_mem>>
      %267 = tpu.memref_squeeze %266 : memref<1x!tpu.dma_semaphore, #tpu.memory_space<semaphore_mem>> -> memref<!tpu.dma_semaphore, #tpu.memory_space<semaphore_mem>>
      tpu.enqueue_dma source(%263 : memref<160xf32, #tpu.memory_space<any>>) target(%265 : memref<160xf32, #tpu.memory_space<vmem>>) target_semaphore(%267 : memref<!tpu.dma_semaphore, #tpu.memory_space<semaphore_mem>>)
    }
    %c112_i32_66 = arith.constant 112 : i32
    %c0_i32_67 = arith.constant 0 : i32
    %c112_i32_68 = arith.constant 112 : i32
    %c0_i32_69 = arith.constant 0 : i32
    %c0_i32_70 = arith.constant 0 : i32
    %146 = tpu.memref_slice %arg2[%c0_i32_67, %c0_i32_70] : memref<600x160xf32, #tpu.memory_space<any>> -> memref<1x160xf32, #tpu.memory_space<any>>
    %147 = tpu.memref_squeeze %146 : memref<1x160xf32, #tpu.memory_space<any>> -> memref<160xf32, #tpu.memory_space<any>>
    %c0_i32_71 = arith.constant 0 : i32
    %148 = tpu.memref_slice %arg3[%c112_i32_68, %c0_i32_71] : memref<128x160xf32, #tpu.memory_space<vmem>> -> memref<1x160xf32, #tpu.memory_space<vmem>>
    %149 = tpu.memref_squeeze %148 : memref<1x160xf32, #tpu.memory_space<vmem>> -> memref<160xf32, #tpu.memory_space<vmem>>
    %150 = tpu.memref_slice %arg4[%c0_i32_69] : memref<16x!tpu.dma_semaphore, #tpu.memory_space<semaphore_mem>> -> memref<1x!tpu.dma_semaphore, #tpu.memory_space<semaphore_mem>>
    %151 = tpu.memref_squeeze %150 : memref<1x!tpu.dma_semaphore, #tpu.memory_space<semaphore_mem>> -> memref<!tpu.dma_semaphore, #tpu.memory_space<semaphore_mem>>
    tpu.wait_dma2 semaphore(%151 : memref<!tpu.dma_semaphore, #tpu.memory_space<semaphore_mem>>) src(%147 : memref<160xf32, #tpu.memory_space<any>>) dst(%149 : memref<160xf32, #tpu.memory_space<vmem>>)
    %c0_i32_72 = arith.constant 0 : i32
    %c113_i32 = arith.constant 113 : i32
    %c1_i32_73 = arith.constant 1 : i32
    %c0_i32_74 = arith.constant 0 : i32
    %152 = tpu.memref_slice %arg2[%c0_i32_72, %c0_i32_74] : memref<600x160xf32, #tpu.memory_space<any>> -> memref<1x160xf32, #tpu.memory_space<any>>
    %153 = tpu.memref_squeeze %152 : memref<1x160xf32, #tpu.memory_space<any>> -> memref<160xf32, #tpu.memory_space<any>>
    %c0_i32_75 = arith.constant 0 : i32
    %154 = tpu.memref_slice %arg3[%c113_i32, %c0_i32_75] : memref<128x160xf32, #tpu.memory_space<vmem>> -> memref<1x160xf32, #tpu.memory_space<vmem>>
    %155 = tpu.memref_squeeze %154 : memref<1x160xf32, #tpu.memory_space<vmem>> -> memref<160xf32, #tpu.memory_space<vmem>>
    %156 = tpu.memref_slice %arg4[%c1_i32_73] : memref<16x!tpu.dma_semaphore, #tpu.memory_space<semaphore_mem>> -> memref<1x!tpu.dma_semaphore, #tpu.memory_space<semaphore_mem>>
    %157 = tpu.memref_squeeze %156 : memref<1x!tpu.dma_semaphore, #tpu.memory_space<semaphore_mem>> -> memref<!tpu.dma_semaphore, #tpu.memory_space<semaphore_mem>>
    tpu.wait_dma2 semaphore(%157 : memref<!tpu.dma_semaphore, #tpu.memory_space<semaphore_mem>>) src(%153 : memref<160xf32, #tpu.memory_space<any>>) dst(%155 : memref<160xf32, #tpu.memory_space<vmem>>)
    %c0_i32_76 = arith.constant 0 : i32
    %c114_i32 = arith.constant 114 : i32
    %c2_i32_77 = arith.constant 2 : i32
    %c0_i32_78 = arith.constant 0 : i32
    %158 = tpu.memref_slice %arg2[%c0_i32_76, %c0_i32_78] : memref<600x160xf32, #tpu.memory_space<any>> -> memref<1x160xf32, #tpu.memory_space<any>>
    %159 = tpu.memref_squeeze %158 : memref<1x160xf32, #tpu.memory_space<any>> -> memref<160xf32, #tpu.memory_space<any>>
    %c0_i32_79 = arith.constant 0 : i32
    %160 = tpu.memref_slice %arg3[%c114_i32, %c0_i32_79] : memref<128x160xf32, #tpu.memory_space<vmem>> -> memref<1x160xf32, #tpu.memory_space<vmem>>
    %161 = tpu.memref_squeeze %160 : memref<1x160xf32, #tpu.memory_space<vmem>> -> memref<160xf32, #tpu.memory_space<vmem>>
    %162 = tpu.memref_slice %arg4[%c2_i32_77] : memref<16x!tpu.dma_semaphore, #tpu.memory_space<semaphore_mem>> -> memref<1x!tpu.dma_semaphore, #tpu.memory_space<semaphore_mem>>
    %163 = tpu.memref_squeeze %162 : memref<1x!tpu.dma_semaphore, #tpu.memory_space<semaphore_mem>> -> memref<!tpu.dma_semaphore, #tpu.memory_space<semaphore_mem>>
    tpu.wait_dma2 semaphore(%163 : memref<!tpu.dma_semaphore, #tpu.memory_space<semaphore_mem>>) src(%159 : memref<160xf32, #tpu.memory_space<any>>) dst(%161 : memref<160xf32, #tpu.memory_space<vmem>>)
    %c0_i32_80 = arith.constant 0 : i32
    %c115_i32 = arith.constant 115 : i32
    %c3_i32_81 = arith.constant 3 : i32
    %c0_i32_82 = arith.constant 0 : i32
    %164 = tpu.memref_slice %arg2[%c0_i32_80, %c0_i32_82] : memref<600x160xf32, #tpu.memory_space<any>> -> memref<1x160xf32, #tpu.memory_space<any>>
    %165 = tpu.memref_squeeze %164 : memref<1x160xf32, #tpu.memory_space<any>> -> memref<160xf32, #tpu.memory_space<any>>
    %c0_i32_83 = arith.constant 0 : i32
    %166 = tpu.memref_slice %arg3[%c115_i32, %c0_i32_83] : memref<128x160xf32, #tpu.memory_space<vmem>> -> memref<1x160xf32, #tpu.memory_space<vmem>>
    %167 = tpu.memref_squeeze %166 : memref<1x160xf32, #tpu.memory_space<vmem>> -> memref<160xf32, #tpu.memory_space<vmem>>
    %168 = tpu.memref_slice %arg4[%c3_i32_81] : memref<16x!tpu.dma_semaphore, #tpu.memory_space<semaphore_mem>> -> memref<1x!tpu.dma_semaphore, #tpu.memory_space<semaphore_mem>>
    %169 = tpu.memref_squeeze %168 : memref<1x!tpu.dma_semaphore, #tpu.memory_space<semaphore_mem>> -> memref<!tpu.dma_semaphore, #tpu.memory_space<semaphore_mem>>
    tpu.wait_dma2 semaphore(%169 : memref<!tpu.dma_semaphore, #tpu.memory_space<semaphore_mem>>) src(%165 : memref<160xf32, #tpu.memory_space<any>>) dst(%167 : memref<160xf32, #tpu.memory_space<vmem>>)
    %c0_i32_84 = arith.constant 0 : i32
    %c116_i32 = arith.constant 116 : i32
    %c4_i32_85 = arith.constant 4 : i32
    %c0_i32_86 = arith.constant 0 : i32
    %170 = tpu.memref_slice %arg2[%c0_i32_84, %c0_i32_86] : memref<600x160xf32, #tpu.memory_space<any>> -> memref<1x160xf32, #tpu.memory_space<any>>
    %171 = tpu.memref_squeeze %170 : memref<1x160xf32, #tpu.memory_space<any>> -> memref<160xf32, #tpu.memory_space<any>>
    %c0_i32_87 = arith.constant 0 : i32
    %172 = tpu.memref_slice %arg3[%c116_i32, %c0_i32_87] : memref<128x160xf32, #tpu.memory_space<vmem>> -> memref<1x160xf32, #tpu.memory_space<vmem>>
    %173 = tpu.memref_squeeze %172 : memref<1x160xf32, #tpu.memory_space<vmem>> -> memref<160xf32, #tpu.memory_space<vmem>>
    %174 = tpu.memref_slice %arg4[%c4_i32_85] : memref<16x!tpu.dma_semaphore, #tpu.memory_space<semaphore_mem>> -> memref<1x!tpu.dma_semaphore, #tpu.memory_space<semaphore_mem>>
    %175 = tpu.memref_squeeze %174 : memref<1x!tpu.dma_semaphore, #tpu.memory_space<semaphore_mem>> -> memref<!tpu.dma_semaphore, #tpu.memory_space<semaphore_mem>>
    tpu.wait_dma2 semaphore(%175 : memref<!tpu.dma_semaphore, #tpu.memory_space<semaphore_mem>>) src(%171 : memref<160xf32, #tpu.memory_space<any>>) dst(%173 : memref<160xf32, #tpu.memory_space<vmem>>)
    %c0_i32_88 = arith.constant 0 : i32
    %c117_i32 = arith.constant 117 : i32
    %c5_i32_89 = arith.constant 5 : i32
    %c0_i32_90 = arith.constant 0 : i32
    %176 = tpu.memref_slice %arg2[%c0_i32_88, %c0_i32_90] : memref<600x160xf32, #tpu.memory_space<any>> -> memref<1x160xf32, #tpu.memory_space<any>>
    %177 = tpu.memref_squeeze %176 : memref<1x160xf32, #tpu.memory_space<any>> -> memref<160xf32, #tpu.memory_space<any>>
    %c0_i32_91 = arith.constant 0 : i32
    %178 = tpu.memref_slice %arg3[%c117_i32, %c0_i32_91] : memref<128x160xf32, #tpu.memory_space<vmem>> -> memref<1x160xf32, #tpu.memory_space<vmem>>
    %179 = tpu.memref_squeeze %178 : memref<1x160xf32, #tpu.memory_space<vmem>> -> memref<160xf32, #tpu.memory_space<vmem>>
    %180 = tpu.memref_slice %arg4[%c5_i32_89] : memref<16x!tpu.dma_semaphore, #tpu.memory_space<semaphore_mem>> -> memref<1x!tpu.dma_semaphore, #tpu.memory_space<semaphore_mem>>
    %181 = tpu.memref_squeeze %180 : memref<1x!tpu.dma_semaphore, #tpu.memory_space<semaphore_mem>> -> memref<!tpu.dma_semaphore, #tpu.memory_space<semaphore_mem>>
    tpu.wait_dma2 semaphore(%181 : memref<!tpu.dma_semaphore, #tpu.memory_space<semaphore_mem>>) src(%177 : memref<160xf32, #tpu.memory_space<any>>) dst(%179 : memref<160xf32, #tpu.memory_space<vmem>>)
    %c0_i32_92 = arith.constant 0 : i32
    %c118_i32 = arith.constant 118 : i32
    %c6_i32_93 = arith.constant 6 : i32
    %c0_i32_94 = arith.constant 0 : i32
    %182 = tpu.memref_slice %arg2[%c0_i32_92, %c0_i32_94] : memref<600x160xf32, #tpu.memory_space<any>> -> memref<1x160xf32, #tpu.memory_space<any>>
    %183 = tpu.memref_squeeze %182 : memref<1x160xf32, #tpu.memory_space<any>> -> memref<160xf32, #tpu.memory_space<any>>
    %c0_i32_95 = arith.constant 0 : i32
    %184 = tpu.memref_slice %arg3[%c118_i32, %c0_i32_95] : memref<128x160xf32, #tpu.memory_space<vmem>> -> memref<1x160xf32, #tpu.memory_space<vmem>>
    %185 = tpu.memref_squeeze %184 : memref<1x160xf32, #tpu.memory_space<vmem>> -> memref<160xf32, #tpu.memory_space<vmem>>
    %186 = tpu.memref_slice %arg4[%c6_i32_93] : memref<16x!tpu.dma_semaphore, #tpu.memory_space<semaphore_mem>> -> memref<1x!tpu.dma_semaphore, #tpu.memory_space<semaphore_mem>>
    %187 = tpu.memref_squeeze %186 : memref<1x!tpu.dma_semaphore, #tpu.memory_space<semaphore_mem>> -> memref<!tpu.dma_semaphore, #tpu.memory_space<semaphore_mem>>
    tpu.wait_dma2 semaphore(%187 : memref<!tpu.dma_semaphore, #tpu.memory_space<semaphore_mem>>) src(%183 : memref<160xf32, #tpu.memory_space<any>>) dst(%185 : memref<160xf32, #tpu.memory_space<vmem>>)
    %c0_i32_96 = arith.constant 0 : i32
    %c119_i32 = arith.constant 119 : i32
    %c7_i32_97 = arith.constant 7 : i32
    %c0_i32_98 = arith.constant 0 : i32
    %188 = tpu.memref_slice %arg2[%c0_i32_96, %c0_i32_98] : memref<600x160xf32, #tpu.memory_space<any>> -> memref<1x160xf32, #tpu.memory_space<any>>
    %189 = tpu.memref_squeeze %188 : memref<1x160xf32, #tpu.memory_space<any>> -> memref<160xf32, #tpu.memory_space<any>>
    %c0_i32_99 = arith.constant 0 : i32
    %190 = tpu.memref_slice %arg3[%c119_i32, %c0_i32_99] : memref<128x160xf32, #tpu.memory_space<vmem>> -> memref<1x160xf32, #tpu.memory_space<vmem>>
    %191 = tpu.memref_squeeze %190 : memref<1x160xf32, #tpu.memory_space<vmem>> -> memref<160xf32, #tpu.memory_space<vmem>>
    %192 = tpu.memref_slice %arg4[%c7_i32_97] : memref<16x!tpu.dma_semaphore, #tpu.memory_space<semaphore_mem>> -> memref<1x!tpu.dma_semaphore, #tpu.memory_space<semaphore_mem>>
    %193 = tpu.memref_squeeze %192 : memref<1x!tpu.dma_semaphore, #tpu.memory_space<semaphore_mem>> -> memref<!tpu.dma_semaphore, #tpu.memory_space<semaphore_mem>>
    tpu.wait_dma2 semaphore(%193 : memref<!tpu.dma_semaphore, #tpu.memory_space<semaphore_mem>>) src(%189 : memref<160xf32, #tpu.memory_space<any>>) dst(%191 : memref<160xf32, #tpu.memory_space<vmem>>)
    %c0_i32_100 = arith.constant 0 : i32
    %c120_i32 = arith.constant 120 : i32
    %c8_i32_101 = arith.constant 8 : i32
    %c0_i32_102 = arith.constant 0 : i32
    %194 = tpu.memref_slice %arg2[%c0_i32_100, %c0_i32_102] : memref<600x160xf32, #tpu.memory_space<any>> -> memref<1x160xf32, #tpu.memory_space<any>>
    %195 = tpu.memref_squeeze %194 : memref<1x160xf32, #tpu.memory_space<any>> -> memref<160xf32, #tpu.memory_space<any>>
    %c0_i32_103 = arith.constant 0 : i32
    %196 = tpu.memref_slice %arg3[%c120_i32, %c0_i32_103] : memref<128x160xf32, #tpu.memory_space<vmem>> -> memref<1x160xf32, #tpu.memory_space<vmem>>
    %197 = tpu.memref_squeeze %196 : memref<1x160xf32, #tpu.memory_space<vmem>> -> memref<160xf32, #tpu.memory_space<vmem>>
    %198 = tpu.memref_slice %arg4[%c8_i32_101] : memref<16x!tpu.dma_semaphore, #tpu.memory_space<semaphore_mem>> -> memref<1x!tpu.dma_semaphore, #tpu.memory_space<semaphore_mem>>
    %199 = tpu.memref_squeeze %198 : memref<1x!tpu.dma_semaphore, #tpu.memory_space<semaphore_mem>> -> memref<!tpu.dma_semaphore, #tpu.memory_space<semaphore_mem>>
    tpu.wait_dma2 semaphore(%199 : memref<!tpu.dma_semaphore, #tpu.memory_space<semaphore_mem>>) src(%195 : memref<160xf32, #tpu.memory_space<any>>) dst(%197 : memref<160xf32, #tpu.memory_space<vmem>>)
    %c0_i32_104 = arith.constant 0 : i32
    %c121_i32 = arith.constant 121 : i32
    %c9_i32_105 = arith.constant 9 : i32
    %c0_i32_106 = arith.constant 0 : i32
    %200 = tpu.memref_slice %arg2[%c0_i32_104, %c0_i32_106] : memref<600x160xf32, #tpu.memory_space<any>> -> memref<1x160xf32, #tpu.memory_space<any>>
    %201 = tpu.memref_squeeze %200 : memref<1x160xf32, #tpu.memory_space<any>> -> memref<160xf32, #tpu.memory_space<any>>
    %c0_i32_107 = arith.constant 0 : i32
    %202 = tpu.memref_slice %arg3[%c121_i32, %c0_i32_107] : memref<128x160xf32, #tpu.memory_space<vmem>> -> memref<1x160xf32, #tpu.memory_space<vmem>>
    %203 = tpu.memref_squeeze %202 : memref<1x160xf32, #tpu.memory_space<vmem>> -> memref<160xf32, #tpu.memory_space<vmem>>
    %204 = tpu.memref_slice %arg4[%c9_i32_105] : memref<16x!tpu.dma_semaphore, #tpu.memory_space<semaphore_mem>> -> memref<1x!tpu.dma_semaphore, #tpu.memory_space<semaphore_mem>>
    %205 = tpu.memref_squeeze %204 : memref<1x!tpu.dma_semaphore, #tpu.memory_space<semaphore_mem>> -> memref<!tpu.dma_semaphore, #tpu.memory_space<semaphore_mem>>
    tpu.wait_dma2 semaphore(%205 : memref<!tpu.dma_semaphore, #tpu.memory_space<semaphore_mem>>) src(%201 : memref<160xf32, #tpu.memory_space<any>>) dst(%203 : memref<160xf32, #tpu.memory_space<vmem>>)
    %c0_i32_108 = arith.constant 0 : i32
    %c122_i32 = arith.constant 122 : i32
    %c10_i32_109 = arith.constant 10 : i32
    %c0_i32_110 = arith.constant 0 : i32
    %206 = tpu.memref_slice %arg2[%c0_i32_108, %c0_i32_110] : memref<600x160xf32, #tpu.memory_space<any>> -> memref<1x160xf32, #tpu.memory_space<any>>
    %207 = tpu.memref_squeeze %206 : memref<1x160xf32, #tpu.memory_space<any>> -> memref<160xf32, #tpu.memory_space<any>>
    %c0_i32_111 = arith.constant 0 : i32
    %208 = tpu.memref_slice %arg3[%c122_i32, %c0_i32_111] : memref<128x160xf32, #tpu.memory_space<vmem>> -> memref<1x160xf32, #tpu.memory_space<vmem>>
    %209 = tpu.memref_squeeze %208 : memref<1x160xf32, #tpu.memory_space<vmem>> -> memref<160xf32, #tpu.memory_space<vmem>>
    %210 = tpu.memref_slice %arg4[%c10_i32_109] : memref<16x!tpu.dma_semaphore, #tpu.memory_space<semaphore_mem>> -> memref<1x!tpu.dma_semaphore, #tpu.memory_space<semaphore_mem>>
    %211 = tpu.memref_squeeze %210 : memref<1x!tpu.dma_semaphore, #tpu.memory_space<semaphore_mem>> -> memref<!tpu.dma_semaphore, #tpu.memory_space<semaphore_mem>>
    tpu.wait_dma2 semaphore(%211 : memref<!tpu.dma_semaphore, #tpu.memory_space<semaphore_mem>>) src(%207 : memref<160xf32, #tpu.memory_space<any>>) dst(%209 : memref<160xf32, #tpu.memory_space<vmem>>)
    %c0_i32_112 = arith.constant 0 : i32
    %c123_i32 = arith.constant 123 : i32
    %c11_i32_113 = arith.constant 11 : i32
    %c0_i32_114 = arith.constant 0 : i32
    %212 = tpu.memref_slice %arg2[%c0_i32_112, %c0_i32_114] : memref<600x160xf32, #tpu.memory_space<any>> -> memref<1x160xf32, #tpu.memory_space<any>>
    %213 = tpu.memref_squeeze %212 : memref<1x160xf32, #tpu.memory_space<any>> -> memref<160xf32, #tpu.memory_space<any>>
    %c0_i32_115 = arith.constant 0 : i32
    %214 = tpu.memref_slice %arg3[%c123_i32, %c0_i32_115] : memref<128x160xf32, #tpu.memory_space<vmem>> -> memref<1x160xf32, #tpu.memory_space<vmem>>
    %215 = tpu.memref_squeeze %214 : memref<1x160xf32, #tpu.memory_space<vmem>> -> memref<160xf32, #tpu.memory_space<vmem>>
    %216 = tpu.memref_slice %arg4[%c11_i32_113] : memref<16x!tpu.dma_semaphore, #tpu.memory_space<semaphore_mem>> -> memref<1x!tpu.dma_semaphore, #tpu.memory_space<semaphore_mem>>
    %217 = tpu.memref_squeeze %216 : memref<1x!tpu.dma_semaphore, #tpu.memory_space<semaphore_mem>> -> memref<!tpu.dma_semaphore, #tpu.memory_space<semaphore_mem>>
    tpu.wait_dma2 semaphore(%217 : memref<!tpu.dma_semaphore, #tpu.memory_space<semaphore_mem>>) src(%213 : memref<160xf32, #tpu.memory_space<any>>) dst(%215 : memref<160xf32, #tpu.memory_space<vmem>>)
    %c0_i32_116 = arith.constant 0 : i32
    %c124_i32 = arith.constant 124 : i32
    %c12_i32_117 = arith.constant 12 : i32
    %c0_i32_118 = arith.constant 0 : i32
    %218 = tpu.memref_slice %arg2[%c0_i32_116, %c0_i32_118] : memref<600x160xf32, #tpu.memory_space<any>> -> memref<1x160xf32, #tpu.memory_space<any>>
    %219 = tpu.memref_squeeze %218 : memref<1x160xf32, #tpu.memory_space<any>> -> memref<160xf32, #tpu.memory_space<any>>
    %c0_i32_119 = arith.constant 0 : i32
    %220 = tpu.memref_slice %arg3[%c124_i32, %c0_i32_119] : memref<128x160xf32, #tpu.memory_space<vmem>> -> memref<1x160xf32, #tpu.memory_space<vmem>>
    %221 = tpu.memref_squeeze %220 : memref<1x160xf32, #tpu.memory_space<vmem>> -> memref<160xf32, #tpu.memory_space<vmem>>
    %222 = tpu.memref_slice %arg4[%c12_i32_117] : memref<16x!tpu.dma_semaphore, #tpu.memory_space<semaphore_mem>> -> memref<1x!tpu.dma_semaphore, #tpu.memory_space<semaphore_mem>>
    %223 = tpu.memref_squeeze %222 : memref<1x!tpu.dma_semaphore, #tpu.memory_space<semaphore_mem>> -> memref<!tpu.dma_semaphore, #tpu.memory_space<semaphore_mem>>
    tpu.wait_dma2 semaphore(%223 : memref<!tpu.dma_semaphore, #tpu.memory_space<semaphore_mem>>) src(%219 : memref<160xf32, #tpu.memory_space<any>>) dst(%221 : memref<160xf32, #tpu.memory_space<vmem>>)
    %c0_i32_120 = arith.constant 0 : i32
    %c125_i32 = arith.constant 125 : i32
    %c13_i32_121 = arith.constant 13 : i32
    %c0_i32_122 = arith.constant 0 : i32
    %224 = tpu.memref_slice %arg2[%c0_i32_120, %c0_i32_122] : memref<600x160xf32, #tpu.memory_space<any>> -> memref<1x160xf32, #tpu.memory_space<any>>
    %225 = tpu.memref_squeeze %224 : memref<1x160xf32, #tpu.memory_space<any>> -> memref<160xf32, #tpu.memory_space<any>>
    %c0_i32_123 = arith.constant 0 : i32
    %226 = tpu.memref_slice %arg3[%c125_i32, %c0_i32_123] : memref<128x160xf32, #tpu.memory_space<vmem>> -> memref<1x160xf32, #tpu.memory_space<vmem>>
    %227 = tpu.memref_squeeze %226 : memref<1x160xf32, #tpu.memory_space<vmem>> -> memref<160xf32, #tpu.memory_space<vmem>>
    %228 = tpu.memref_slice %arg4[%c13_i32_121] : memref<16x!tpu.dma_semaphore, #tpu.memory_space<semaphore_mem>> -> memref<1x!tpu.dma_semaphore, #tpu.memory_space<semaphore_mem>>
    %229 = tpu.memref_squeeze %228 : memref<1x!tpu.dma_semaphore, #tpu.memory_space<semaphore_mem>> -> memref<!tpu.dma_semaphore, #tpu.memory_space<semaphore_mem>>
    tpu.wait_dma2 semaphore(%229 : memref<!tpu.dma_semaphore, #tpu.memory_space<semaphore_mem>>) src(%225 : memref<160xf32, #tpu.memory_space<any>>) dst(%227 : memref<160xf32, #tpu.memory_space<vmem>>)
    %c0_i32_124 = arith.constant 0 : i32
    %c126_i32 = arith.constant 126 : i32
    %c14_i32_125 = arith.constant 14 : i32
    %c0_i32_126 = arith.constant 0 : i32
    %230 = tpu.memref_slice %arg2[%c0_i32_124, %c0_i32_126] : memref<600x160xf32, #tpu.memory_space<any>> -> memref<1x160xf32, #tpu.memory_space<any>>
    %231 = tpu.memref_squeeze %230 : memref<1x160xf32, #tpu.memory_space<any>> -> memref<160xf32, #tpu.memory_space<any>>
    %c0_i32_127 = arith.constant 0 : i32
    %232 = tpu.memref_slice %arg3[%c126_i32, %c0_i32_127] : memref<128x160xf32, #tpu.memory_space<vmem>> -> memref<1x160xf32, #tpu.memory_space<vmem>>
    %233 = tpu.memref_squeeze %232 : memref<1x160xf32, #tpu.memory_space<vmem>> -> memref<160xf32, #tpu.memory_space<vmem>>
    %234 = tpu.memref_slice %arg4[%c14_i32_125] : memref<16x!tpu.dma_semaphore, #tpu.memory_space<semaphore_mem>> -> memref<1x!tpu.dma_semaphore, #tpu.memory_space<semaphore_mem>>
    %235 = tpu.memref_squeeze %234 : memref<1x!tpu.dma_semaphore, #tpu.memory_space<semaphore_mem>> -> memref<!tpu.dma_semaphore, #tpu.memory_space<semaphore_mem>>
    tpu.wait_dma2 semaphore(%235 : memref<!tpu.dma_semaphore, #tpu.memory_space<semaphore_mem>>) src(%231 : memref<160xf32, #tpu.memory_space<any>>) dst(%233 : memref<160xf32, #tpu.memory_space<vmem>>)
    %c0_i32_128 = arith.constant 0 : i32
    %c127_i32 = arith.constant 127 : i32
    %c15_i32_129 = arith.constant 15 : i32
    %c0_i32_130 = arith.constant 0 : i32
    %236 = tpu.memref_slice %arg2[%c0_i32_128, %c0_i32_130] : memref<600x160xf32, #tpu.memory_space<any>> -> memref<1x160xf32, #tpu.memory_space<any>>
    %237 = tpu.memref_squeeze %236 : memref<1x160xf32, #tpu.memory_space<any>> -> memref<160xf32, #tpu.memory_space<any>>
    %c0_i32_131 = arith.constant 0 : i32
    %238 = tpu.memref_slice %arg3[%c127_i32, %c0_i32_131] : memref<128x160xf32, #tpu.memory_space<vmem>> -> memref<1x160xf32, #tpu.memory_space<vmem>>
    %239 = tpu.memref_squeeze %238 : memref<1x160xf32, #tpu.memory_space<vmem>> -> memref<160xf32, #tpu.memory_space<vmem>>
    %240 = tpu.memref_slice %arg4[%c15_i32_129] : memref<16x!tpu.dma_semaphore, #tpu.memory_space<semaphore_mem>> -> memref<1x!tpu.dma_semaphore, #tpu.memory_space<semaphore_mem>>
    %241 = tpu.memref_squeeze %240 : memref<1x!tpu.dma_semaphore, #tpu.memory_space<semaphore_mem>> -> memref<!tpu.dma_semaphore, #tpu.memory_space<semaphore_mem>>
    tpu.wait_dma2 semaphore(%241 : memref<!tpu.dma_semaphore, #tpu.memory_space<semaphore_mem>>) src(%237 : memref<160xf32, #tpu.memory_space<any>>) dst(%239 : memref<160xf32, #tpu.memory_space<vmem>>)
    return
  }
  func.func @transform_1(%arg0: i32, %arg1: memref<640xi32, #tpu.memory_space<smem>>) -> (i32, i32) {
    %c0_i32 = arith.constant 0 : i32
    %c0_i32_0 = arith.constant 0 : i32
    return %arg0, %c0_i32 : i32, i32
  }
}

</mosaic_0001>

<llo_original>
// kernel: tpu_custom_call.1
$region0: #{tpu_custom_call.1}
  #allocation0 [shape = 'u32[]', space=smem, size = 0x4, offset = 0x4, fixed_abs, tag = 'smem constant byte address 0x4 - core index']
  #allocation1 [shape = 'u32[144,128]{1,0:T(1,128)}', space=vmem, size = 0x12000, scoped, tag = 'internal scratch']
  #allocation2 [shape = 's32[16]{0}', space=sflag, size = 0x40, scoped, tag = 'scratch operand']
  #allocation3 [shape = 's32[1]{0}', space=sflag, size = 0x4, scoped, tag = 'scoped memory for tpu_custom_call.1']
  #allocation4 [shape = 'u8[2560]{0}', space=smem, size = 0xa00, scoped, tag = 'prefetched SMEM operand 0']
  #allocation5 [shape = 's32[]', space=sflag, size = 0x4, offset = 0, fixed_abs, tag = 'sflag constant byte address 0x0 - dummy sync flag']
  #allocation6 [shape = 's32[]', space=sflag, size = 0x4, offset = 0, fixed_abs, tag = 'sflag constant byte address 0x0 - dummy sync flag']
  #allocation7 [shape = 's32[]', space=sflag, size = 0x4, offset = 0, fixed_abs, tag = 'sflag constant byte address 0x0 - dummy sync flag']
  #allocation8 [shape = 's32[]', space=sflag, size = 0x4, offset = 0, fixed_abs, tag = 'sflag constant byte address 0x0 - dummy sync flag']
  #allocation9 [shape = 's32[]', space=sflag, size = 0x4, offset = 0, fixed_abs, tag = 'sflag constant byte address 0x0 - dummy sync flag']
  #allocation10 [shape = 's32[]', space=sflag, size = 0x4, offset = 0, fixed_abs, tag = 'sflag constant byte address 0x0 - dummy sync flag']
  #allocation11 [shape = 's32[]', space=sflag, size = 0x4, offset = 0, fixed_abs, tag = 'sflag constant byte address 0x0 - dummy sync flag']
  #allocation12 [shape = 's32[]', space=sflag, size = 0x4, offset = 0, fixed_abs, tag = 'sflag constant byte address 0x0 - dummy sync flag']
  #allocation13 [shape = 's32[]', space=sflag, size = 0x4, offset = 0, fixed_abs, tag = 'sflag constant byte address 0x0 - dummy sync flag']
  #allocation14 [shape = 's32[]', space=sflag, size = 0x4, offset = 0, fixed_abs, tag = 'sflag constant byte address 0x0 - dummy sync flag']
  #allocation15 [shape = 's32[]', space=sflag, size = 0x4, offset = 0, fixed_abs, tag = 'sflag constant byte address 0x0 - dummy sync flag']
  #allocation16 [shape = 's32[]', space=sflag, size = 0x4, offset = 0, fixed_abs, tag = 'sflag constant byte address 0x0 - dummy sync flag']
  #allocation17 [shape = 's32[]', space=sflag, size = 0x4, offset = 0, fixed_abs, tag = 'sflag constant byte address 0x0 - dummy sync flag']
  #allocation18 [shape = 's32[]', space=sflag, size = 0x4, offset = 0, fixed_abs, tag = 'sflag constant byte address 0x0 - dummy sync flag']
  #allocation19 [shape = 's32[]', space=sflag, size = 0x4, offset = 0, fixed_abs, tag = 'sflag constant byte address 0x0 - dummy sync flag']
  #allocation20 [shape = 's32[]', space=sflag, size = 0x4, offset = 0, fixed_abs, tag = 'sflag constant byte address 0x0 - dummy sync flag']
  #allocation21 [shape = 's32[]', space=sflag, size = 0x4, offset = 0, fixed_abs, tag = 'sflag constant byte address 0x0 - dummy sync flag']
  %s0 = inlined_call_operand.vmem [shape: s32[640], index: 0, kind: input, shape index: {}]
  %s1 = inlined_call_operand.vmem [shape: f32[600,160], index: 1, kind: input, shape index: {}]
  %s2 = inlined_call_operand.vmem [shape: f32[640,160], index: 2, kind: output, shape index: {}]
  %s3 = sld [smem:[#allocation0]]
  $region542: #{tpu_custom_call.1} parent=0
    _
  %s5 = ssub.s32 1, %s3
  %s6 = scalar_select 0, %s5, %s3
  %s7 = sshll.u32 %s0, 4
  %s8 = int_to_ptr.vmem [resolvable:$true] %s7
  %10 = dma.vmem_to_smem %s8, 80, [#allocation4], [#allocation3]
  %11 = dma.done [#allocation3], 80
  %12 = sfence
  loop: start=0, step=1, limit=6
  $region2: #{tpu_custom_call.1} parent=0 // loop_pre_header
    _
  $region3: #{tpu_custom_call.1} parent=0 // loop_header
    %s14 = sphi 0, %s18
    %p15 = scmp.ge.s32.totalorder %s14, 6
    %s23 = sphi 0, %s25
    %s26 = sphi 0, %s23
    %s36 = sphi 0, %s26
  $region4: #{tpu_custom_call.1} parent=0 // loop_header_branch
    %17 = sbr.rel (%p15) target = $region8
  $region5: #{tpu_custom_call.1} parent=0 // loop_body
    %s19 = ssub.s32 %s14, 1
    %s20 = sadd.s32 %s14, 1
    %s21 = ssub.s32 %s14, %s20
    %p22 = scmp.eq.s32.totalorder %s21, 0
    %s24 = sadd.s32 %s23, 1
    %s25 = scalar_select %p22, %s23, %s24
    %p27 = pneg %p22
    %p28 = scmp.eq.s32.totalorder %s14, 4
    %p29 = por %p27, %p28
    %p30 = scmp.ne.s32.totalorder %s23, %s26
    %p31 = scmp.eq.s32.totalorder %s14, 0
    %p32 = por %p30, %p31
    %p33 = scmp.ne.s32.totalorder %s23, %s26
    %p34 = scmp.eq.s32.totalorder %s19, 4
    %p35 = por %p33, %p34
    %p37 = scmp.ne.s32.totalorder %s26, %s36
    %p38 = scmp.eq.s32.totalorder %s19, 0
    %p39 = por %p37, %p38
    %p40 = scmp.lt.s32.totalorder %s14, 5
    // Predicated region
    $region9: #{tpu_custom_call.1} parent=5 // pred_check
      %p41 = pneg %p40
    $region10: #{tpu_custom_call.1} parent=5 // pred_check_branch
      %43 = sbr.rel (%p41) target = $region12
    $region11: #{tpu_custom_call.1} parent=5 // pred_region
      %p44 = pneg %p32
      %p45 = pneg %p29
      %s46 = smul.u32 16, %s14
      %p47 = scmp.lt.s32.totalorder %s46, 79
      %s48 = scalar_select %p47, %s46, 79
      %s49 = smul.addr %s48, 2
      %s50 = smul.addr %s49, 8
      %s51 = scalar_lea.vmem %s2, %s50
      %s52 = smul.u32 16, %s14
      %p53 = scmp.lt.s32.totalorder %s52, 79
      %s54 = scalar_select %p53, %s52, 79
      %s55 = smul.addr %s54, 2
      %s56 = smul.addr %s55, 8
      %s57 = scalar_lea.vmem %s2, %s56
      %s58 = smul.u32 16, %s14
      %s59 = smul.u32 %s14, 128
      %s60 = sld [smem:[#allocation4 + %s59]]
      %s61 = sshrl.u32 %s60, 3
      %s62 = sand.u32 %s60, 7
      %s63 = smul.u32 %s61, 16
      %s64 = sadd.s32 %s62, %s63
      %s65 = scalar_lea.vmem %s1, %s64
      %p67 = scmp.lt.u32.totalorder 1, 8
      %p68 = pneg %p67
      // Predicated region
      $region13: #{tpu_custom_call.1} parent=11 // pred_check
        _
      $region14: #{tpu_custom_call.1} parent=11 // pred_check_branch
        %70 = sbr.rel (%p67) target = $region16
      $region15: #{tpu_custom_call.1} parent=11 // pred_region
        %s87 = sand.u32 1, 7
        %p88 = scmp.eq.s32.totalorder %s87, 0
        %p89 = pneg %p88
        // Predicated region
        $region28: #{tpu_custom_call.1} parent=15 // pred_check
          _
        $region29: #{tpu_custom_call.1} parent=15 // pred_check_branch
          %91 = sbr.rel (%p88) target = $region31
        $region30: #{tpu_custom_call.1} parent=15 // pred_region
          %s92 = sand.u32 1, 7
          %s93 = ssub.s32 1, %s92
          %s94 = scalar_lea.vmem %s65, %s93
          %s95 = ssub.s32 1, %s92
          %s96 = scalar_lea.vmem %s57, %s95
          %s97 = sshllo.u32 0, %s92
          loop: start=0, step=1, limit=1
          $region32: #{tpu_custom_call.1} parent=30 // loop_pre_header
            _
          $region33: #{tpu_custom_call.1} parent=30 // loop_header
            %s99 = sphi 0, %s103
            %p100 = scmp.ge.s32.totalorder %s99, 1
            %s104 = sphi %s94, %s94
            %s105 = sphi %s96, %s96
          $region34: #{tpu_custom_call.1} parent=30 // loop_header_branch
            %102 = sbr.rel (%p100) target = $region38
          $region35: #{tpu_custom_call.1} parent=30 // loop_body
            %v106 = vld [vmem:[%s104] sm:%s97]
            %107 = vst [vmem:[%s105] sm:%s97] %v106
            %v108 = vld [vmem:[%s104 + $0x8] sm:%s97]
            %109 = vst [vmem:[%s105 + $0x8] sm:%s97] %v108
          $region36: #{tpu_custom_call.1} parent=30 // loop_footer
            %s103 = sadd.s32 1, %s99
          $region37: #{tpu_custom_call.1} parent=30 // loop_footer_branch
            %98 = sbr.rel target = $region33
          $region38: #{tpu_custom_call.1} parent=30 // loop_exit
            _
        $region31: #{tpu_custom_call.1} parent=15 // pred_fallthru
          _
      $region16: #{tpu_custom_call.1} parent=11 // pred_fallthru
        _
      // Predicated region
      $region17: #{tpu_custom_call.1} parent=11 // pred_check
        %p71 = pneg %p67
      $region18: #{tpu_custom_call.1} parent=11 // pred_check_branch
        %73 = sbr.rel (%p71) target = $region20
      $region19: #{tpu_custom_call.1} parent=11 // pred_region
        %s74 = sshllo.u32 0, 1
        loop: start=0, step=1, limit=1
        $region21: #{tpu_custom_call.1} parent=19 // loop_pre_header
          _
        $region22: #{tpu_custom_call.1} parent=19 // loop_header
          %s76 = sphi 0, %s80
          %p77 = scmp.ge.s32.totalorder %s76, 1
          %s81 = sphi %s65, %s65
          %s82 = sphi %s57, %s57
        $region23: #{tpu_custom_call.1} parent=19 // loop_header_branch
          %79 = sbr.rel (%p77) target = $region27
        $region24: #{tpu_custom_call.1} parent=19 // loop_body
          %v83 = vld [vmem:[%s81] sm:%s74]
          %84 = vst [vmem:[%s82] sm:%s74] %v83
          %v85 = vld [vmem:[%s81 + $0x8] sm:%s74]
          %86 = vst [vmem:[%s82 + $0x8] sm:%s74] %v85
        $region25: #{tpu_custom_call.1} parent=19 // loop_footer
          %s80 = sadd.s32 1, %s76
        $region26: #{tpu_custom_call.1} parent=19 // loop_footer_branch
          %75 = sbr.rel target = $region22
        $region27: #{tpu_custom_call.1} parent=19 // loop_exit
          _
      $region20: #{tpu_custom_call.1} parent=11 // pred_fallthru
        _
      // Predicated region
      $region39: #{tpu_custom_call.1} parent=11 // pred_check
        _
      $region40: #{tpu_custom_call.1} parent=11 // pred_check_branch
        %112 = sbr.rel (0) target = $region42
      $region41: #{tpu_custom_call.1} parent=11 // pred_region
        %113 = vsyncadd [#allocation2], 32
      $region42: #{tpu_custom_call.1} parent=11 // pred_fallthru
        _
      %s114 = sadd.s32 %s59, 1
      %s115 = sld [smem:[#allocation4 + %s114]]
      %s116 = sshrl.u32 %s115, 3
      %s117 = sand.u32 %s115, 7
      %s118 = smul.u32 %s116, 16
      %s119 = sadd.s32 %s117, %s118
      %s120 = scalar_lea.vmem %s1, %s119
      %s121 = scalar_lea.vmem %s57, 1
      %s122 = scalar_lea.sflag [#allocation2], 1
      %p124 = scmp.lt.u32.totalorder 1, 8
      %p125 = pneg %p124
      // Predicated region
      $region43: #{tpu_custom_call.1} parent=11 // pred_check
        _
      $region44: #{tpu_custom_call.1} parent=11 // pred_check_branch
        %127 = sbr.rel (%p124) target = $region46
      $region45: #{tpu_custom_call.1} parent=11 // pred_region
        %s144 = sand.u32 1, 7
        %p145 = scmp.eq.s32.totalorder %s144, 0
        %p146 = pneg %p145
        // Predicated region
        $region58: #{tpu_custom_call.1} parent=45 // pred_check
          _
        $region59: #{tpu_custom_call.1} parent=45 // pred_check_branch
          %148 = sbr.rel (%p145) target = $region61
        $region60: #{tpu_custom_call.1} parent=45 // pred_region
          %s149 = sand.u32 1, 7
          %s150 = ssub.s32 1, %s149
          %s151 = scalar_lea.vmem %s120, %s150
          %s152 = ssub.s32 1, %s149
          %s153 = scalar_lea.vmem %s121, %s152
          %s154 = sshllo.u32 0, %s149
          loop: start=0, step=1, limit=1
          $region62: #{tpu_custom_call.1} parent=60 // loop_pre_header
            _
          $region63: #{tpu_custom_call.1} parent=60 // loop_header
            %s156 = sphi 0, %s160
            %p157 = scmp.ge.s32.totalorder %s156, 1
            %s161 = sphi %s151, %s151
            %s162 = sphi %s153, %s153
          $region64: #{tpu_custom_call.1} parent=60 // loop_header_branch
            %159 = sbr.rel (%p157) target = $region68
          $region65: #{tpu_custom_call.1} parent=60 // loop_body
            %v163 = vld [vmem:[%s161] sm:%s154]
            %164 = vst [vmem:[%s162] sm:%s154] %v163
            %v165 = vld [vmem:[%s161 + $0x8] sm:%s154]
            %166 = vst [vmem:[%s162 + $0x8] sm:%s154] %v165
          $region66: #{tpu_custom_call.1} parent=60 // loop_footer
            %s160 = sadd.s32 1, %s156
          $region67: #{tpu_custom_call.1} parent=60 // loop_footer_branch
            %155 = sbr.rel target = $region63
          $region68: #{tpu_custom_call.1} parent=60 // loop_exit
            _
        $region61: #{tpu_custom_call.1} parent=45 // pred_fallthru
          _
      $region46: #{tpu_custom_call.1} parent=11 // pred_fallthru
        _
      // Predicated region
      $region47: #{tpu_custom_call.1} parent=11 // pred_check
        %p128 = pneg %p124
      $region48: #{tpu_custom_call.1} parent=11 // pred_check_branch
        %130 = sbr.rel (%p128) target = $region50
      $region49: #{tpu_custom_call.1} parent=11 // pred_region
        %s131 = sshllo.u32 0, 1
        loop: start=0, step=1, limit=1
        $region51: #{tpu_custom_call.1} parent=49 // loop_pre_header
          _
        $region52: #{tpu_custom_call.1} parent=49 // loop_header
          %s133 = sphi 0, %s137
          %p134 = scmp.ge.s32.totalorder %s133, 1
          %s138 = sphi %s120, %s120
          %s139 = sphi %s121, %s121
        $region53: #{tpu_custom_call.1} parent=49 // loop_header_branch
          %136 = sbr.rel (%p134) target = $region57
        $region54: #{tpu_custom_call.1} parent=49 // loop_body
          %v140 = vld [vmem:[%s138] sm:%s131]
          %141 = vst [vmem:[%s139] sm:%s131] %v140
          %v142 = vld [vmem:[%s138 + $0x8] sm:%s131]
          %143 = vst [vmem:[%s139 + $0x8] sm:%s131] %v142
        $region55: #{tpu_custom_call.1} parent=49 // loop_footer
          %s137 = sadd.s32 1, %s133
        $region56: #{tpu_custom_call.1} parent=49 // loop_footer_branch
          %132 = sbr.rel target = $region52
        $region57: #{tpu_custom_call.1} parent=49 // loop_exit
          _
      $region50: #{tpu_custom_call.1} parent=11 // pred_fallthru
        _
      // Predicated region
      $region69: #{tpu_custom_call.1} parent=11 // pred_check
        _
      $region70: #{tpu_custom_call.1} parent=11 // pred_check_branch
        %169 = sbr.rel (0) target = $region72
      $region71: #{tpu_custom_call.1} parent=11 // pred_region
        %170 = vsyncadd %s122, 32
      $region72: #{tpu_custom_call.1} parent=11 // pred_fallthru
        _
      %s171 = sadd.s32 %s59, 2
      %s172 = sld [smem:[#allocation4 + %s171]]
      %s173 = sshrl.u32 %s172, 3
      %s174 = sand.u32 %s172, 7
      %s175 = smul.u32 %s173, 16
      %s176 = sadd.s32 %s174, %s175
      %s177 = scalar_lea.vmem %s1, %s176
      %s178 = scalar_lea.vmem %s57, 2
      %s179 = scalar_lea.sflag [#allocation2], 2
      %p181 = scmp.lt.u32.totalorder 1, 8
      %p182 = pneg %p181
      // Predicated region
      $region73: #{tpu_custom_call.1} parent=11 // pred_check
        _
      $region74: #{tpu_custom_call.1} parent=11 // pred_check_branch
        %184 = sbr.rel (%p181) target = $region76
      $region75: #{tpu_custom_call.1} parent=11 // pred_region
        %s201 = sand.u32 1, 7
        %p202 = scmp.eq.s32.totalorder %s201, 0
        %p203 = pneg %p202
        // Predicated region
        $region88: #{tpu_custom_call.1} parent=75 // pred_check
          _
        $region89: #{tpu_custom_call.1} parent=75 // pred_check_branch
          %205 = sbr.rel (%p202) target = $region91
        $region90: #{tpu_custom_call.1} parent=75 // pred_region
          %s206 = sand.u32 1, 7
          %s207 = ssub.s32 1, %s206
          %s208 = scalar_lea.vmem %s177, %s207
          %s209 = ssub.s32 1, %s206
          %s210 = scalar_lea.vmem %s178, %s209
          %s211 = sshllo.u32 0, %s206
          loop: start=0, step=1, limit=1
          $region92: #{tpu_custom_call.1} parent=90 // loop_pre_header
            _
          $region93: #{tpu_custom_call.1} parent=90 // loop_header
            %s213 = sphi 0, %s217
            %p214 = scmp.ge.s32.totalorder %s213, 1
            %s218 = sphi %s208, %s208
            %s219 = sphi %s210, %s210
          $region94: #{tpu_custom_call.1} parent=90 // loop_header_branch
            %216 = sbr.rel (%p214) target = $region98
          $region95: #{tpu_custom_call.1} parent=90 // loop_body
            %v220 = vld [vmem:[%s218] sm:%s211]
            %221 = vst [vmem:[%s219] sm:%s211] %v220
            %v222 = vld [vmem:[%s218 + $0x8] sm:%s211]
            %223 = vst [vmem:[%s219 + $0x8] sm:%s211] %v222
          $region96: #{tpu_custom_call.1} parent=90 // loop_footer
            %s217 = sadd.s32 1, %s213
          $region97: #{tpu_custom_call.1} parent=90 // loop_footer_branch
            %212 = sbr.rel target = $region93
          $region98: #{tpu_custom_call.1} parent=90 // loop_exit
            _
        $region91: #{tpu_custom_call.1} parent=75 // pred_fallthru
          _
      $region76: #{tpu_custom_call.1} parent=11 // pred_fallthru
        _
      // Predicated region
      $region77: #{tpu_custom_call.1} parent=11 // pred_check
        %p185 = pneg %p181
      $region78: #{tpu_custom_call.1} parent=11 // pred_check_branch
        %187 = sbr.rel (%p185) target = $region80
      $region79: #{tpu_custom_call.1} parent=11 // pred_region
        %s188 = sshllo.u32 0, 1
        loop: start=0, step=1, limit=1
        $region81: #{tpu_custom_call.1} parent=79 // loop_pre_header
          _
        $region82: #{tpu_custom_call.1} parent=79 // loop_header
          %s190 = sphi 0, %s194
          %p191 = scmp.ge.s32.totalorder %s190, 1
          %s195 = sphi %s177, %s177
          %s196 = sphi %s178, %s178
        $region83: #{tpu_custom_call.1} parent=79 // loop_header_branch
          %193 = sbr.rel (%p191) target = $region87
        $region84: #{tpu_custom_call.1} parent=79 // loop_body
          %v197 = vld [vmem:[%s195] sm:%s188]
          %198 = vst [vmem:[%s196] sm:%s188] %v197
          %v199 = vld [vmem:[%s195 + $0x8] sm:%s188]
          %200 = vst [vmem:[%s196 + $0x8] sm:%s188] %v199
        $region85: #{tpu_custom_call.1} parent=79 // loop_footer
          %s194 = sadd.s32 1, %s190
        $region86: #{tpu_custom_call.1} parent=79 // loop_footer_branch
          %189 = sbr.rel target = $region82
        $region87: #{tpu_custom_call.1} parent=79 // loop_exit
          _
      $region80: #{tpu_custom_call.1} parent=11 // pred_fallthru
        _
      // Predicated region
      $region99: #{tpu_custom_call.1} parent=11 // pred_check
        _
      $region100: #{tpu_custom_call.1} parent=11 // pred_check_branch
        %226 = sbr.rel (0) target = $region102
      $region101: #{tpu_custom_call.1} parent=11 // pred_region
        %227 = vsyncadd %s179, 32
      $region102: #{tpu_custom_call.1} parent=11 // pred_fallthru
        _
      %s228 = sadd.s32 %s59, 3
      %s229 = sld [smem:[#allocation4 + %s228]]
      %s230 = sshrl.u32 %s229, 3
      %s231 = sand.u32 %s229, 7
      %s232 = smul.u32 %s230, 16
      %s233 = sadd.s32 %s231, %s232
      %s234 = scalar_lea.vmem %s1, %s233
      %s235 = scalar_lea.vmem %s57, 3
      %s236 = scalar_lea.sflag [#allocation2], 3
      %p238 = scmp.lt.u32.totalorder 1, 8
      %p239 = pneg %p238
      // Predicated region
      $region103: #{tpu_custom_call.1} parent=11 // pred_check
        _
      $region104: #{tpu_custom_call.1} parent=11 // pred_check_branch
        %241 = sbr.rel (%p238) target = $region106
      $region105: #{tpu_custom_call.1} parent=11 // pred_region
        %s258 = sand.u32 1, 7
        %p259 = scmp.eq.s32.totalorder %s258, 0
        %p260 = pneg %p259
        // Predicated region
        $region118: #{tpu_custom_call.1} parent=105 // pred_check
          _
        $region119: #{tpu_custom_call.1} parent=105 // pred_check_branch
          %262 = sbr.rel (%p259) target = $region121
        $region120: #{tpu_custom_call.1} parent=105 // pred_region
          %s263 = sand.u32 1, 7
          %s264 = ssub.s32 1, %s263
          %s265 = scalar_lea.vmem %s234, %s264
          %s266 = ssub.s32 1, %s263
          %s267 = scalar_lea.vmem %s235, %s266
          %s268 = sshllo.u32 0, %s263
          loop: start=0, step=1, limit=1
          $region122: #{tpu_custom_call.1} parent=120 // loop_pre_header
            _
          $region123: #{tpu_custom_call.1} parent=120 // loop_header
            %s270 = sphi 0, %s274
            %p271 = scmp.ge.s32.totalorder %s270, 1
            %s275 = sphi %s265, %s265
            %s276 = sphi %s267, %s267
          $region124: #{tpu_custom_call.1} parent=120 // loop_header_branch
            %273 = sbr.rel (%p271) target = $region128
          $region125: #{tpu_custom_call.1} parent=120 // loop_body
            %v277 = vld [vmem:[%s275] sm:%s268]
            %278 = vst [vmem:[%s276] sm:%s268] %v277
            %v279 = vld [vmem:[%s275 + $0x8] sm:%s268]
            %280 = vst [vmem:[%s276 + $0x8] sm:%s268] %v279
          $region126: #{tpu_custom_call.1} parent=120 // loop_footer
            %s274 = sadd.s32 1, %s270
          $region127: #{tpu_custom_call.1} parent=120 // loop_footer_branch
            %269 = sbr.rel target = $region123
          $region128: #{tpu_custom_call.1} parent=120 // loop_exit
            _
        $region121: #{tpu_custom_call.1} parent=105 // pred_fallthru
          _
      $region106: #{tpu_custom_call.1} parent=11 // pred_fallthru
        _
      // Predicated region
      $region107: #{tpu_custom_call.1} parent=11 // pred_check
        %p242 = pneg %p238
      $region108: #{tpu_custom_call.1} parent=11 // pred_check_branch
        %244 = sbr.rel (%p242) target = $region110
      $region109: #{tpu_custom_call.1} parent=11 // pred_region
        %s245 = sshllo.u32 0, 1
        loop: start=0, step=1, limit=1
        $region111: #{tpu_custom_call.1} parent=109 // loop_pre_header
          _
        $region112: #{tpu_custom_call.1} parent=109 // loop_header
          %s247 = sphi 0, %s251
          %p248 = scmp.ge.s32.totalorder %s247, 1
          %s252 = sphi %s234, %s234
          %s253 = sphi %s235, %s235
        $region113: #{tpu_custom_call.1} parent=109 // loop_header_branch
          %250 = sbr.rel (%p248) target = $region117
        $region114: #{tpu_custom_call.1} parent=109 // loop_body
          %v254 = vld [vmem:[%s252] sm:%s245]
          %255 = vst [vmem:[%s253] sm:%s245] %v254
          %v256 = vld [vmem:[%s252 + $0x8] sm:%s245]
          %257 = vst [vmem:[%s253 + $0x8] sm:%s245] %v256
        $region115: #{tpu_custom_call.1} parent=109 // loop_footer
          %s251 = sadd.s32 1, %s247
        $region116: #{tpu_custom_call.1} parent=109 // loop_footer_branch
          %246 = sbr.rel target = $region112
        $region117: #{tpu_custom_call.1} parent=109 // loop_exit
          _
      $region110: #{tpu_custom_call.1} parent=11 // pred_fallthru
        _
      // Predicated region
      $region129: #{tpu_custom_call.1} parent=11 // pred_check
        _
      $region130: #{tpu_custom_call.1} parent=11 // pred_check_branch
        %283 = sbr.rel (0) target = $region132
      $region131: #{tpu_custom_call.1} parent=11 // pred_region
        %284 = vsyncadd %s236, 32
      $region132: #{tpu_custom_call.1} parent=11 // pred_fallthru
        _
      %s285 = sadd.s32 %s59, 4
      %s286 = sld [smem:[#allocation4 + %s285]]
      %s287 = sshrl.u32 %s286, 3
      %s288 = sand.u32 %s286, 7
      %s289 = smul.u32 %s287, 16
      %s290 = sadd.s32 %s288, %s289
      %s291 = scalar_lea.vmem %s1, %s290
      %s292 = scalar_lea.vmem %s57, 4
      %s293 = scalar_lea.sflag [#allocation2], 4
      %p295 = scmp.lt.u32.totalorder 1, 8
      %p296 = pneg %p295
      // Predicated region
      $region133: #{tpu_custom_call.1} parent=11 // pred_check
        _
      $region134: #{tpu_custom_call.1} parent=11 // pred_check_branch
        %298 = sbr.rel (%p295) target = $region136
      $region135: #{tpu_custom_call.1} parent=11 // pred_region
        %s315 = sand.u32 1, 7
        %p316 = scmp.eq.s32.totalorder %s315, 0
        %p317 = pneg %p316
        // Predicated region
        $region148: #{tpu_custom_call.1} parent=135 // pred_check
          _
        $region149: #{tpu_custom_call.1} parent=135 // pred_check_branch
          %319 = sbr.rel (%p316) target = $region151
        $region150: #{tpu_custom_call.1} parent=135 // pred_region
          %s320 = sand.u32 1, 7
          %s321 = ssub.s32 1, %s320
          %s322 = scalar_lea.vmem %s291, %s321
          %s323 = ssub.s32 1, %s320
          %s324 = scalar_lea.vmem %s292, %s323
          %s325 = sshllo.u32 0, %s320
          loop: start=0, step=1, limit=1
          $region152: #{tpu_custom_call.1} parent=150 // loop_pre_header
            _
          $region153: #{tpu_custom_call.1} parent=150 // loop_header
            %s327 = sphi 0, %s331
            %p328 = scmp.ge.s32.totalorder %s327, 1
            %s332 = sphi %s322, %s322
            %s333 = sphi %s324, %s324
          $region154: #{tpu_custom_call.1} parent=150 // loop_header_branch
            %330 = sbr.rel (%p328) target = $region158
          $region155: #{tpu_custom_call.1} parent=150 // loop_body
            %v334 = vld [vmem:[%s332] sm:%s325]
            %335 = vst [vmem:[%s333] sm:%s325] %v334
            %v336 = vld [vmem:[%s332 + $0x8] sm:%s325]
            %337 = vst [vmem:[%s333 + $0x8] sm:%s325] %v336
          $region156: #{tpu_custom_call.1} parent=150 // loop_footer
            %s331 = sadd.s32 1, %s327
          $region157: #{tpu_custom_call.1} parent=150 // loop_footer_branch
            %326 = sbr.rel target = $region153
          $region158: #{tpu_custom_call.1} parent=150 // loop_exit
            _
        $region151: #{tpu_custom_call.1} parent=135 // pred_fallthru
          _
      $region136: #{tpu_custom_call.1} parent=11 // pred_fallthru
        _
      // Predicated region
      $region137: #{tpu_custom_call.1} parent=11 // pred_check
        %p299 = pneg %p295
      $region138: #{tpu_custom_call.1} parent=11 // pred_check_branch
        %301 = sbr.rel (%p299) target = $region140
      $region139: #{tpu_custom_call.1} parent=11 // pred_region
        %s302 = sshllo.u32 0, 1
        loop: start=0, step=1, limit=1
        $region141: #{tpu_custom_call.1} parent=139 // loop_pre_header
          _
        $region142: #{tpu_custom_call.1} parent=139 // loop_header
          %s304 = sphi 0, %s308
          %p305 = scmp.ge.s32.totalorder %s304, 1
          %s309 = sphi %s291, %s291
          %s310 = sphi %s292, %s292
        $region143: #{tpu_custom_call.1} parent=139 // loop_header_branch
          %307 = sbr.rel (%p305) target = $region147
        $region144: #{tpu_custom_call.1} parent=139 // loop_body
          %v311 = vld [vmem:[%s309] sm:%s302]
          %312 = vst [vmem:[%s310] sm:%s302] %v311
          %v313 = vld [vmem:[%s309 + $0x8] sm:%s302]
          %314 = vst [vmem:[%s310 + $0x8] sm:%s302] %v313
        $region145: #{tpu_custom_call.1} parent=139 // loop_footer
          %s308 = sadd.s32 1, %s304
        $region146: #{tpu_custom_call.1} parent=139 // loop_footer_branch
          %303 = sbr.rel target = $region142
        $region147: #{tpu_custom_call.1} parent=139 // loop_exit
          _
      $region140: #{tpu_custom_call.1} parent=11 // pred_fallthru
        _
      // Predicated region
      $region159: #{tpu_custom_call.1} parent=11 // pred_check
        _
      $region160: #{tpu_custom_call.1} parent=11 // pred_check_branch
        %340 = sbr.rel (0) target = $region162
      $region161: #{tpu_custom_call.1} parent=11 // pred_region
        %341 = vsyncadd %s293, 32
      $region162: #{tpu_custom_call.1} parent=11 // pred_fallthru
        _
      %s342 = sadd.s32 %s59, 5
      %s343 = sld [smem:[#allocation4 + %s342]]
      %s344 = sshrl.u32 %s343, 3
      %s345 = sand.u32 %s343, 7
      %s346 = smul.u32 %s344, 16
      %s347 = sadd.s32 %s345, %s346
      %s348 = scalar_lea.vmem %s1, %s347
      %s349 = scalar_lea.vmem %s57, 5
      %s350 = scalar_lea.sflag [#allocation2], 5
      %p352 = scmp.lt.u32.totalorder 1, 8
      %p353 = pneg %p352
      // Predicated region
      $region163: #{tpu_custom_call.1} parent=11 // pred_check
        _
      $region164: #{tpu_custom_call.1} parent=11 // pred_check_branch
        %355 = sbr.rel (%p352) target = $region166
      $region165: #{tpu_custom_call.1} parent=11 // pred_region
        %s372 = sand.u32 1, 7
        %p373 = scmp.eq.s32.totalorder %s372, 0
        %p374 = pneg %p373
        // Predicated region
        $region178: #{tpu_custom_call.1} parent=165 // pred_check
          _
        $region179: #{tpu_custom_call.1} parent=165 // pred_check_branch
          %376 = sbr.rel (%p373) target = $region181
        $region180: #{tpu_custom_call.1} parent=165 // pred_region
          %s377 = sand.u32 1, 7
          %s378 = ssub.s32 1, %s377
          %s379 = scalar_lea.vmem %s348, %s378
          %s380 = ssub.s32 1, %s377
          %s381 = scalar_lea.vmem %s349, %s380
          %s382 = sshllo.u32 0, %s377
          loop: start=0, step=1, limit=1
          $region182: #{tpu_custom_call.1} parent=180 // loop_pre_header
            _
          $region183: #{tpu_custom_call.1} parent=180 // loop_header
            %s384 = sphi 0, %s388
            %p385 = scmp.ge.s32.totalorder %s384, 1
            %s389 = sphi %s379, %s379
            %s390 = sphi %s381, %s381
          $region184: #{tpu_custom_call.1} parent=180 // loop_header_branch
            %387 = sbr.rel (%p385) target = $region188
          $region185: #{tpu_custom_call.1} parent=180 // loop_body
            %v391 = vld [vmem:[%s389] sm:%s382]
            %392 = vst [vmem:[%s390] sm:%s382] %v391
            %v393 = vld [vmem:[%s389 + $0x8] sm:%s382]
            %394 = vst [vmem:[%s390 + $0x8] sm:%s382] %v393
          $region186: #{tpu_custom_call.1} parent=180 // loop_footer
            %s388 = sadd.s32 1, %s384
          $region187: #{tpu_custom_call.1} parent=180 // loop_footer_branch
            %383 = sbr.rel target = $region183
          $region188: #{tpu_custom_call.1} parent=180 // loop_exit
            _
        $region181: #{tpu_custom_call.1} parent=165 // pred_fallthru
          _
      $region166: #{tpu_custom_call.1} parent=11 // pred_fallthru
        _
      // Predicated region
      $region167: #{tpu_custom_call.1} parent=11 // pred_check
        %p356 = pneg %p352
      $region168: #{tpu_custom_call.1} parent=11 // pred_check_branch
        %358 = sbr.rel (%p356) target = $region170
      $region169: #{tpu_custom_call.1} parent=11 // pred_region
        %s359 = sshllo.u32 0, 1
        loop: start=0, step=1, limit=1
        $region171: #{tpu_custom_call.1} parent=169 // loop_pre_header
          _
        $region172: #{tpu_custom_call.1} parent=169 // loop_header
          %s361 = sphi 0, %s365
          %p362 = scmp.ge.s32.totalorder %s361, 1
          %s366 = sphi %s348, %s348
          %s367 = sphi %s349, %s349
        $region173: #{tpu_custom_call.1} parent=169 // loop_header_branch
          %364 = sbr.rel (%p362) target = $region177
        $region174: #{tpu_custom_call.1} parent=169 // loop_body
          %v368 = vld [vmem:[%s366] sm:%s359]
          %369 = vst [vmem:[%s367] sm:%s359] %v368
          %v370 = vld [vmem:[%s366 + $0x8] sm:%s359]
          %371 = vst [vmem:[%s367 + $0x8] sm:%s359] %v370
        $region175: #{tpu_custom_call.1} parent=169 // loop_footer
          %s365 = sadd.s32 1, %s361
        $region176: #{tpu_custom_call.1} parent=169 // loop_footer_branch
          %360 = sbr.rel target = $region172
        $region177: #{tpu_custom_call.1} parent=169 // loop_exit
          _
      $region170: #{tpu_custom_call.1} parent=11 // pred_fallthru
        _
      // Predicated region
      $region189: #{tpu_custom_call.1} parent=11 // pred_check
        _
      $region190: #{tpu_custom_call.1} parent=11 // pred_check_branch
        %397 = sbr.rel (0) target = $region192
      $region191: #{tpu_custom_call.1} parent=11 // pred_region
        %398 = vsyncadd %s350, 32
      $region192: #{tpu_custom_call.1} parent=11 // pred_fallthru
        _
      %s399 = sadd.s32 %s59, 6
      %s400 = sld [smem:[#allocation4 + %s399]]
      %s401 = sshrl.u32 %s400, 3
      %s402 = sand.u32 %s400, 7
      %s403 = smul.u32 %s401, 16
      %s404 = sadd.s32 %s402, %s403
      %s405 = scalar_lea.vmem %s1, %s404
      %s406 = scalar_lea.vmem %s57, 6
      %s407 = scalar_lea.sflag [#allocation2], 6
      %p409 = scmp.lt.u32.totalorder 1, 8
      %p410 = pneg %p409
      // Predicated region
      $region193: #{tpu_custom_call.1} parent=11 // pred_check
        _
      $region194: #{tpu_custom_call.1} parent=11 // pred_check_branch
        %412 = sbr.rel (%p409) target = $region196
      $region195: #{tpu_custom_call.1} parent=11 // pred_region
        %s429 = sand.u32 1, 7
        %p430 = scmp.eq.s32.totalorder %s429, 0
        %p431 = pneg %p430
        // Predicated region
        $region208: #{tpu_custom_call.1} parent=195 // pred_check
          _
        $region209: #{tpu_custom_call.1} parent=195 // pred_check_branch
          %433 = sbr.rel (%p430) target = $region211
        $region210: #{tpu_custom_call.1} parent=195 // pred_region
          %s434 = sand.u32 1, 7
          %s435 = ssub.s32 1, %s434
          %s436 = scalar_lea.vmem %s405, %s435
          %s437 = ssub.s32 1, %s434
          %s438 = scalar_lea.vmem %s406, %s437
          %s439 = sshllo.u32 0, %s434
          loop: start=0, step=1, limit=1
          $region212: #{tpu_custom_call.1} parent=210 // loop_pre_header
            _
          $region213: #{tpu_custom_call.1} parent=210 // loop_header
            %s441 = sphi 0, %s445
            %p442 = scmp.ge.s32.totalorder %s441, 1
            %s446 = sphi %s436, %s436
            %s447 = sphi %s438, %s438
          $region214: #{tpu_custom_call.1} parent=210 // loop_header_branch
            %444 = sbr.rel (%p442) target = $region218
          $region215: #{tpu_custom_call.1} parent=210 // loop_body
            %v448 = vld [vmem:[%s446] sm:%s439]
            %449 = vst [vmem:[%s447] sm:%s439] %v448
            %v450 = vld [vmem:[%s446 + $0x8] sm:%s439]
            %451 = vst [vmem:[%s447 + $0x8] sm:%s439] %v450
          $region216: #{tpu_custom_call.1} parent=210 // loop_footer
            %s445 = sadd.s32 1, %s441
          $region217: #{tpu_custom_call.1} parent=210 // loop_footer_branch
            %440 = sbr.rel target = $region213
          $region218: #{tpu_custom_call.1} parent=210 // loop_exit
            _
        $region211: #{tpu_custom_call.1} parent=195 // pred_fallthru
          _
      $region196: #{tpu_custom_call.1} parent=11 // pred_fallthru
        _
      // Predicated region
      $region197: #{tpu_custom_call.1} parent=11 // pred_check
        %p413 = pneg %p409
      $region198: #{tpu_custom_call.1} parent=11 // pred_check_branch
        %415 = sbr.rel (%p413) target = $region200
      $region199: #{tpu_custom_call.1} parent=11 // pred_region
        %s416 = sshllo.u32 0, 1
        loop: start=0, step=1, limit=1
        $region201: #{tpu_custom_call.1} parent=199 // loop_pre_header
          _
        $region202: #{tpu_custom_call.1} parent=199 // loop_header
          %s418 = sphi 0, %s422
          %p419 = scmp.ge.s32.totalorder %s418, 1
          %s423 = sphi %s405, %s405
          %s424 = sphi %s406, %s406
        $region203: #{tpu_custom_call.1} parent=199 // loop_header_branch
          %421 = sbr.rel (%p419) target = $region207
        $region204: #{tpu_custom_call.1} parent=199 // loop_body
          %v425 = vld [vmem:[%s423] sm:%s416]
          %426 = vst [vmem:[%s424] sm:%s416] %v425
          %v427 = vld [vmem:[%s423 + $0x8] sm:%s416]
          %428 = vst [vmem:[%s424 + $0x8] sm:%s416] %v427
        $region205: #{tpu_custom_call.1} parent=199 // loop_footer
          %s422 = sadd.s32 1, %s418
        $region206: #{tpu_custom_call.1} parent=199 // loop_footer_branch
          %417 = sbr.rel target = $region202
        $region207: #{tpu_custom_call.1} parent=199 // loop_exit
          _
      $region200: #{tpu_custom_call.1} parent=11 // pred_fallthru
        _
      // Predicated region
      $region219: #{tpu_custom_call.1} parent=11 // pred_check
        _
      $region220: #{tpu_custom_call.1} parent=11 // pred_check_branch
        %454 = sbr.rel (0) target = $region222
      $region221: #{tpu_custom_call.1} parent=11 // pred_region
        %455 = vsyncadd %s407, 32
      $region222: #{tpu_custom_call.1} parent=11 // pred_fallthru
        _
      %s456 = sadd.s32 %s59, 7
      %s457 = sld [smem:[#allocation4 + %s456]]
      %s458 = sshrl.u32 %s457, 3
      %s459 = sand.u32 %s457, 7
      %s460 = smul.u32 %s458, 16
      %s461 = sadd.s32 %s459, %s460
      %s462 = scalar_lea.vmem %s1, %s461
      %s463 = scalar_lea.vmem %s57, 7
      %s464 = scalar_lea.sflag [#allocation2], 7
      %p466 = scmp.lt.u32.totalorder 1, 8
      %p467 = pneg %p466
      // Predicated region
      $region223: #{tpu_custom_call.1} parent=11 // pred_check
        _
      $region224: #{tpu_custom_call.1} parent=11 // pred_check_branch
        %469 = sbr.rel (%p466) target = $region226
      $region225: #{tpu_custom_call.1} parent=11 // pred_region
        %s486 = sand.u32 1, 7
        %p487 = scmp.eq.s32.totalorder %s486, 0
        %p488 = pneg %p487
        // Predicated region
        $region238: #{tpu_custom_call.1} parent=225 // pred_check
          _
        $region239: #{tpu_custom_call.1} parent=225 // pred_check_branch
          %490 = sbr.rel (%p487) target = $region241
        $region240: #{tpu_custom_call.1} parent=225 // pred_region
          %s491 = sand.u32 1, 7
          %s492 = ssub.s32 1, %s491
          %s493 = scalar_lea.vmem %s462, %s492
          %s494 = ssub.s32 1, %s491
          %s495 = scalar_lea.vmem %s463, %s494
          %s496 = sshllo.u32 0, %s491
          loop: start=0, step=1, limit=1
          $region242: #{tpu_custom_call.1} parent=240 // loop_pre_header
            _
          $region243: #{tpu_custom_call.1} parent=240 // loop_header
            %s498 = sphi 0, %s502
            %p499 = scmp.ge.s32.totalorder %s498, 1
            %s503 = sphi %s493, %s493
            %s504 = sphi %s495, %s495
          $region244: #{tpu_custom_call.1} parent=240 // loop_header_branch
            %501 = sbr.rel (%p499) target = $region248
          $region245: #{tpu_custom_call.1} parent=240 // loop_body
            %v505 = vld [vmem:[%s503] sm:%s496]
            %506 = vst [vmem:[%s504] sm:%s496] %v505
            %v507 = vld [vmem:[%s503 + $0x8] sm:%s496]
            %508 = vst [vmem:[%s504 + $0x8] sm:%s496] %v507
          $region246: #{tpu_custom_call.1} parent=240 // loop_footer
            %s502 = sadd.s32 1, %s498
          $region247: #{tpu_custom_call.1} parent=240 // loop_footer_branch
            %497 = sbr.rel target = $region243
          $region248: #{tpu_custom_call.1} parent=240 // loop_exit
            _
        $region241: #{tpu_custom_call.1} parent=225 // pred_fallthru
          _
      $region226: #{tpu_custom_call.1} parent=11 // pred_fallthru
        _
      // Predicated region
      $region227: #{tpu_custom_call.1} parent=11 // pred_check
        %p470 = pneg %p466
      $region228: #{tpu_custom_call.1} parent=11 // pred_check_branch
        %472 = sbr.rel (%p470) target = $region230
      $region229: #{tpu_custom_call.1} parent=11 // pred_region
        %s473 = sshllo.u32 0, 1
        loop: start=0, step=1, limit=1
        $region231: #{tpu_custom_call.1} parent=229 // loop_pre_header
          _
        $region232: #{tpu_custom_call.1} parent=229 // loop_header
          %s475 = sphi 0, %s479
          %p476 = scmp.ge.s32.totalorder %s475, 1
          %s480 = sphi %s462, %s462
          %s481 = sphi %s463, %s463
        $region233: #{tpu_custom_call.1} parent=229 // loop_header_branch
          %478 = sbr.rel (%p476) target = $region237
        $region234: #{tpu_custom_call.1} parent=229 // loop_body
          %v482 = vld [vmem:[%s480] sm:%s473]
          %483 = vst [vmem:[%s481] sm:%s473] %v482
          %v484 = vld [vmem:[%s480 + $0x8] sm:%s473]
          %485 = vst [vmem:[%s481 + $0x8] sm:%s473] %v484
        $region235: #{tpu_custom_call.1} parent=229 // loop_footer
          %s479 = sadd.s32 1, %s475
        $region236: #{tpu_custom_call.1} parent=229 // loop_footer_branch
          %474 = sbr.rel target = $region232
        $region237: #{tpu_custom_call.1} parent=229 // loop_exit
          _
      $region230: #{tpu_custom_call.1} parent=11 // pred_fallthru
        _
      // Predicated region
      $region249: #{tpu_custom_call.1} parent=11 // pred_check
        _
      $region250: #{tpu_custom_call.1} parent=11 // pred_check_branch
        %511 = sbr.rel (0) target = $region252
      $region251: #{tpu_custom_call.1} parent=11 // pred_region
        %512 = vsyncadd %s464, 32
      $region252: #{tpu_custom_call.1} parent=11 // pred_fallthru
        _
      %s513 = sadd.s32 %s59, 8
      %s514 = sld [smem:[#allocation4 + %s513]]
      %s515 = sshrl.u32 %s514, 3
      %s516 = sand.u32 %s514, 7
      %s517 = smul.u32 %s515, 16
      %s518 = sadd.s32 %s516, %s517
      %s519 = scalar_lea.vmem %s1, %s518
      %s520 = scalar_lea.vmem %s57, 16
      %s521 = scalar_lea.sflag [#allocation2], 8
      %p523 = scmp.lt.u32.totalorder 1, 8
      %p524 = pneg %p523
      // Predicated region
      $region253: #{tpu_custom_call.1} parent=11 // pred_check
        _
      $region254: #{tpu_custom_call.1} parent=11 // pred_check_branch
        %526 = sbr.rel (%p523) target = $region256
      $region255: #{tpu_custom_call.1} parent=11 // pred_region
        %s543 = sand.u32 1, 7
        %p544 = scmp.eq.s32.totalorder %s543, 0
        %p545 = pneg %p544
        // Predicated region
        $region268: #{tpu_custom_call.1} parent=255 // pred_check
          _
        $region269: #{tpu_custom_call.1} parent=255 // pred_check_branch
          %547 = sbr.rel (%p544) target = $region271
        $region270: #{tpu_custom_call.1} parent=255 // pred_region
          %s548 = sand.u32 1, 7
          %s549 = ssub.s32 1, %s548
          %s550 = scalar_lea.vmem %s519, %s549
          %s551 = ssub.s32 1, %s548
          %s552 = scalar_lea.vmem %s520, %s551
          %s553 = sshllo.u32 0, %s548
          loop: start=0, step=1, limit=1
          $region272: #{tpu_custom_call.1} parent=270 // loop_pre_header
            _
          $region273: #{tpu_custom_call.1} parent=270 // loop_header
            %s555 = sphi 0, %s559
            %p556 = scmp.ge.s32.totalorder %s555, 1
            %s560 = sphi %s550, %s550
            %s561 = sphi %s552, %s552
          $region274: #{tpu_custom_call.1} parent=270 // loop_header_branch
            %558 = sbr.rel (%p556) target = $region278
          $region275: #{tpu_custom_call.1} parent=270 // loop_body
            %v562 = vld [vmem:[%s560] sm:%s553]
            %563 = vst [vmem:[%s561] sm:%s553] %v562
            %v564 = vld [vmem:[%s560 + $0x8] sm:%s553]
            %565 = vst [vmem:[%s561 + $0x8] sm:%s553] %v564
          $region276: #{tpu_custom_call.1} parent=270 // loop_footer
            %s559 = sadd.s32 1, %s555
          $region277: #{tpu_custom_call.1} parent=270 // loop_footer_branch
            %554 = sbr.rel target = $region273
          $region278: #{tpu_custom_call.1} parent=270 // loop_exit
            _
        $region271: #{tpu_custom_call.1} parent=255 // pred_fallthru
          _
      $region256: #{tpu_custom_call.1} parent=11 // pred_fallthru
        _
      // Predicated region
      $region257: #{tpu_custom_call.1} parent=11 // pred_check
        %p527 = pneg %p523
      $region258: #{tpu_custom_call.1} parent=11 // pred_check_branch
        %529 = sbr.rel (%p527) target = $region260
      $region259: #{tpu_custom_call.1} parent=11 // pred_region
        %s530 = sshllo.u32 0, 1
        loop: start=0, step=1, limit=1
        $region261: #{tpu_custom_call.1} parent=259 // loop_pre_header
          _
        $region262: #{tpu_custom_call.1} parent=259 // loop_header
          %s532 = sphi 0, %s536
          %p533 = scmp.ge.s32.totalorder %s532, 1
          %s537 = sphi %s519, %s519
          %s538 = sphi %s520, %s520
        $region263: #{tpu_custom_call.1} parent=259 // loop_header_branch
          %535 = sbr.rel (%p533) target = $region267
        $region264: #{tpu_custom_call.1} parent=259 // loop_body
          %v539 = vld [vmem:[%s537] sm:%s530]
          %540 = vst [vmem:[%s538] sm:%s530] %v539
          %v541 = vld [vmem:[%s537 + $0x8] sm:%s530]
          %542 = vst [vmem:[%s538 + $0x8] sm:%s530] %v541
        $region265: #{tpu_custom_call.1} parent=259 // loop_footer
          %s536 = sadd.s32 1, %s532
        $region266: #{tpu_custom_call.1} parent=259 // loop_footer_branch
          %531 = sbr.rel target = $region262
        $region267: #{tpu_custom_call.1} parent=259 // loop_exit
          _
      $region260: #{tpu_custom_call.1} parent=11 // pred_fallthru
        _
      // Predicated region
      $region279: #{tpu_custom_call.1} parent=11 // pred_check
        _
      $region280: #{tpu_custom_call.1} parent=11 // pred_check_branch
        %568 = sbr.rel (0) target = $region282
      $region281: #{tpu_custom_call.1} parent=11 // pred_region
        %569 = vsyncadd %s521, 32
      $region282: #{tpu_custom_call.1} parent=11 // pred_fallthru
        _
      %s570 = sadd.s32 %s59, 9
      %s571 = sld [smem:[#allocation4 + %s570]]
      %s572 = sshrl.u32 %s571, 3
      %s573 = sand.u32 %s571, 7
      %s574 = smul.u32 %s572, 16
      %s575 = sadd.s32 %s573, %s574
      %s576 = scalar_lea.vmem %s1, %s575
      %s577 = scalar_lea.vmem %s57, 17
      %s578 = scalar_lea.sflag [#allocation2], 9
      %p580 = scmp.lt.u32.totalorder 1, 8
      %p581 = pneg %p580
      // Predicated region
      $region283: #{tpu_custom_call.1} parent=11 // pred_check
        _
      $region284: #{tpu_custom_call.1} parent=11 // pred_check_branch
        %583 = sbr.rel (%p580) target = $region286
      $region285: #{tpu_custom_call.1} parent=11 // pred_region
        %s600 = sand.u32 1, 7
        %p601 = scmp.eq.s32.totalorder %s600, 0
        %p602 = pneg %p601
        // Predicated region
        $region298: #{tpu_custom_call.1} parent=285 // pred_check
          _
        $region299: #{tpu_custom_call.1} parent=285 // pred_check_branch
          %604 = sbr.rel (%p601) target = $region301
        $region300: #{tpu_custom_call.1} parent=285 // pred_region
          %s605 = sand.u32 1, 7
          %s606 = ssub.s32 1, %s605
          %s607 = scalar_lea.vmem %s576, %s606
          %s608 = ssub.s32 1, %s605
          %s609 = scalar_lea.vmem %s577, %s608
          %s610 = sshllo.u32 0, %s605
          loop: start=0, step=1, limit=1
          $region302: #{tpu_custom_call.1} parent=300 // loop_pre_header
            _
          $region303: #{tpu_custom_call.1} parent=300 // loop_header
            %s612 = sphi 0, %s616
            %p613 = scmp.ge.s32.totalorder %s612, 1
            %s617 = sphi %s607, %s607
            %s618 = sphi %s609, %s609
          $region304: #{tpu_custom_call.1} parent=300 // loop_header_branch
            %615 = sbr.rel (%p613) target = $region308
          $region305: #{tpu_custom_call.1} parent=300 // loop_body
            %v619 = vld [vmem:[%s617] sm:%s610]
            %620 = vst [vmem:[%s618] sm:%s610] %v619
            %v621 = vld [vmem:[%s617 + $0x8] sm:%s610]
            %622 = vst [vmem:[%s618 + $0x8] sm:%s610] %v621
          $region306: #{tpu_custom_call.1} parent=300 // loop_footer
            %s616 = sadd.s32 1, %s612
          $region307: #{tpu_custom_call.1} parent=300 // loop_footer_branch
            %611 = sbr.rel target = $region303
          $region308: #{tpu_custom_call.1} parent=300 // loop_exit
            _
        $region301: #{tpu_custom_call.1} parent=285 // pred_fallthru
          _
      $region286: #{tpu_custom_call.1} parent=11 // pred_fallthru
        _
      // Predicated region
      $region287: #{tpu_custom_call.1} parent=11 // pred_check
        %p584 = pneg %p580
      $region288: #{tpu_custom_call.1} parent=11 // pred_check_branch
        %586 = sbr.rel (%p584) target = $region290
      $region289: #{tpu_custom_call.1} parent=11 // pred_region
        %s587 = sshllo.u32 0, 1
        loop: start=0, step=1, limit=1
        $region291: #{tpu_custom_call.1} parent=289 // loop_pre_header
          _
        $region292: #{tpu_custom_call.1} parent=289 // loop_header
          %s589 = sphi 0, %s593
          %p590 = scmp.ge.s32.totalorder %s589, 1
          %s594 = sphi %s576, %s576
          %s595 = sphi %s577, %s577
        $region293: #{tpu_custom_call.1} parent=289 // loop_header_branch
          %592 = sbr.rel (%p590) target = $region297
        $region294: #{tpu_custom_call.1} parent=289 // loop_body
          %v596 = vld [vmem:[%s594] sm:%s587]
          %597 = vst [vmem:[%s595] sm:%s587] %v596
          %v598 = vld [vmem:[%s594 + $0x8] sm:%s587]
          %599 = vst [vmem:[%s595 + $0x8] sm:%s587] %v598
        $region295: #{tpu_custom_call.1} parent=289 // loop_footer
          %s593 = sadd.s32 1, %s589
        $region296: #{tpu_custom_call.1} parent=289 // loop_footer_branch
          %588 = sbr.rel target = $region292
        $region297: #{tpu_custom_call.1} parent=289 // loop_exit
          _
      $region290: #{tpu_custom_call.1} parent=11 // pred_fallthru
        _
      // Predicated region
      $region309: #{tpu_custom_call.1} parent=11 // pred_check
        _
      $region310: #{tpu_custom_call.1} parent=11 // pred_check_branch
        %625 = sbr.rel (0) target = $region312
      $region311: #{tpu_custom_call.1} parent=11 // pred_region
        %626 = vsyncadd %s578, 32
      $region312: #{tpu_custom_call.1} parent=11 // pred_fallthru
        _
      %s627 = sadd.s32 %s59, 10
      %s628 = sld [smem:[#allocation4 + %s627]]
      %s629 = sshrl.u32 %s628, 3
      %s630 = sand.u32 %s628, 7
      %s631 = smul.u32 %s629, 16
      %s632 = sadd.s32 %s630, %s631
      %s633 = scalar_lea.vmem %s1, %s632
      %s634 = scalar_lea.vmem %s57, 18
      %s635 = scalar_lea.sflag [#allocation2], 10
      %p637 = scmp.lt.u32.totalorder 1, 8
      %p638 = pneg %p637
      // Predicated region
      $region313: #{tpu_custom_call.1} parent=11 // pred_check
        _
      $region314: #{tpu_custom_call.1} parent=11 // pred_check_branch
        %640 = sbr.rel (%p637) target = $region316
      $region315: #{tpu_custom_call.1} parent=11 // pred_region
        %s657 = sand.u32 1, 7
        %p658 = scmp.eq.s32.totalorder %s657, 0
        %p659 = pneg %p658
        // Predicated region
        $region328: #{tpu_custom_call.1} parent=315 // pred_check
          _
        $region329: #{tpu_custom_call.1} parent=315 // pred_check_branch
          %661 = sbr.rel (%p658) target = $region331
        $region330: #{tpu_custom_call.1} parent=315 // pred_region
          %s662 = sand.u32 1, 7
          %s663 = ssub.s32 1, %s662
          %s664 = scalar_lea.vmem %s633, %s663
          %s665 = ssub.s32 1, %s662
          %s666 = scalar_lea.vmem %s634, %s665
          %s667 = sshllo.u32 0, %s662
          loop: start=0, step=1, limit=1
          $region332: #{tpu_custom_call.1} parent=330 // loop_pre_header
            _
          $region333: #{tpu_custom_call.1} parent=330 // loop_header
            %s669 = sphi 0, %s673
            %p670 = scmp.ge.s32.totalorder %s669, 1
            %s674 = sphi %s664, %s664
            %s675 = sphi %s666, %s666
          $region334: #{tpu_custom_call.1} parent=330 // loop_header_branch
            %672 = sbr.rel (%p670) target = $region338
          $region335: #{tpu_custom_call.1} parent=330 // loop_body
            %v676 = vld [vmem:[%s674] sm:%s667]
            %677 = vst [vmem:[%s675] sm:%s667] %v676
            %v678 = vld [vmem:[%s674 + $0x8] sm:%s667]
            %679 = vst [vmem:[%s675 + $0x8] sm:%s667] %v678
          $region336: #{tpu_custom_call.1} parent=330 // loop_footer
            %s673 = sadd.s32 1, %s669
          $region337: #{tpu_custom_call.1} parent=330 // loop_footer_branch
            %668 = sbr.rel target = $region333
          $region338: #{tpu_custom_call.1} parent=330 // loop_exit
            _
        $region331: #{tpu_custom_call.1} parent=315 // pred_fallthru
          _
      $region316: #{tpu_custom_call.1} parent=11 // pred_fallthru
        _
      // Predicated region
      $region317: #{tpu_custom_call.1} parent=11 // pred_check
        %p641 = pneg %p637
      $region318: #{tpu_custom_call.1} parent=11 // pred_check_branch
        %643 = sbr.rel (%p641) target = $region320
      $region319: #{tpu_custom_call.1} parent=11 // pred_region
        %s644 = sshllo.u32 0, 1
        loop: start=0, step=1, limit=1
        $region321: #{tpu_custom_call.1} parent=319 // loop_pre_header
          _
        $region322: #{tpu_custom_call.1} parent=319 // loop_header
          %s646 = sphi 0, %s650
          %p647 = scmp.ge.s32.totalorder %s646, 1
          %s651 = sphi %s633, %s633
          %s652 = sphi %s634, %s634
        $region323: #{tpu_custom_call.1} parent=319 // loop_header_branch
          %649 = sbr.rel (%p647) target = $region327
        $region324: #{tpu_custom_call.1} parent=319 // loop_body
          %v653 = vld [vmem:[%s651] sm:%s644]
          %654 = vst [vmem:[%s652] sm:%s644] %v653
          %v655 = vld [vmem:[%s651 + $0x8] sm:%s644]
          %656 = vst [vmem:[%s652 + $0x8] sm:%s644] %v655
        $region325: #{tpu_custom_call.1} parent=319 // loop_footer
          %s650 = sadd.s32 1, %s646
        $region326: #{tpu_custom_call.1} parent=319 // loop_footer_branch
          %645 = sbr.rel target = $region322
        $region327: #{tpu_custom_call.1} parent=319 // loop_exit
          _
      $region320: #{tpu_custom_call.1} parent=11 // pred_fallthru
        _
      // Predicated region
      $region339: #{tpu_custom_call.1} parent=11 // pred_check
        _
      $region340: #{tpu_custom_call.1} parent=11 // pred_check_branch
        %682 = sbr.rel (0) target = $region342
      $region341: #{tpu_custom_call.1} parent=11 // pred_region
        %683 = vsyncadd %s635, 32
      $region342: #{tpu_custom_call.1} parent=11 // pred_fallthru
        _
      %s684 = sadd.s32 %s59, 11
      %s685 = sld [smem:[#allocation4 + %s684]]
      %s686 = sshrl.u32 %s685, 3
      %s687 = sand.u32 %s685, 7
      %s688 = smul.u32 %s686, 16
      %s689 = sadd.s32 %s687, %s688
      %s690 = scalar_lea.vmem %s1, %s689
      %s691 = scalar_lea.vmem %s57, 19
      %s692 = scalar_lea.sflag [#allocation2], 11
      %p694 = scmp.lt.u32.totalorder 1, 8
      %p695 = pneg %p694
      // Predicated region
      $region343: #{tpu_custom_call.1} parent=11 // pred_check
        _
      $region344: #{tpu_custom_call.1} parent=11 // pred_check_branch
        %697 = sbr.rel (%p694) target = $region346
      $region345: #{tpu_custom_call.1} parent=11 // pred_region
        %s714 = sand.u32 1, 7
        %p715 = scmp.eq.s32.totalorder %s714, 0
        %p716 = pneg %p715
        // Predicated region
        $region358: #{tpu_custom_call.1} parent=345 // pred_check
          _
        $region359: #{tpu_custom_call.1} parent=345 // pred_check_branch
          %718 = sbr.rel (%p715) target = $region361
        $region360: #{tpu_custom_call.1} parent=345 // pred_region
          %s719 = sand.u32 1, 7
          %s720 = ssub.s32 1, %s719
          %s721 = scalar_lea.vmem %s690, %s720
          %s722 = ssub.s32 1, %s719
          %s723 = scalar_lea.vmem %s691, %s722
          %s724 = sshllo.u32 0, %s719
          loop: start=0, step=1, limit=1
          $region362: #{tpu_custom_call.1} parent=360 // loop_pre_header
            _
          $region363: #{tpu_custom_call.1} parent=360 // loop_header
            %s726 = sphi 0, %s730
            %p727 = scmp.ge.s32.totalorder %s726, 1
            %s731 = sphi %s721, %s721
            %s732 = sphi %s723, %s723
          $region364: #{tpu_custom_call.1} parent=360 // loop_header_branch
            %729 = sbr.rel (%p727) target = $region368
          $region365: #{tpu_custom_call.1} parent=360 // loop_body
            %v733 = vld [vmem:[%s731] sm:%s724]
            %734 = vst [vmem:[%s732] sm:%s724] %v733
            %v735 = vld [vmem:[%s731 + $0x8] sm:%s724]
            %736 = vst [vmem:[%s732 + $0x8] sm:%s724] %v735
          $region366: #{tpu_custom_call.1} parent=360 // loop_footer
            %s730 = sadd.s32 1, %s726
          $region367: #{tpu_custom_call.1} parent=360 // loop_footer_branch
            %725 = sbr.rel target = $region363
          $region368: #{tpu_custom_call.1} parent=360 // loop_exit
            _
        $region361: #{tpu_custom_call.1} parent=345 // pred_fallthru
          _
      $region346: #{tpu_custom_call.1} parent=11 // pred_fallthru
        _
      // Predicated region
      $region347: #{tpu_custom_call.1} parent=11 // pred_check
        %p698 = pneg %p694
      $region348: #{tpu_custom_call.1} parent=11 // pred_check_branch
        %700 = sbr.rel (%p698) target = $region350
      $region349: #{tpu_custom_call.1} parent=11 // pred_region
        %s701 = sshllo.u32 0, 1
        loop: start=0, step=1, limit=1
        $region351: #{tpu_custom_call.1} parent=349 // loop_pre_header
          _
        $region352: #{tpu_custom_call.1} parent=349 // loop_header
          %s703 = sphi 0, %s707
          %p704 = scmp.ge.s32.totalorder %s703, 1
          %s708 = sphi %s690, %s690
          %s709 = sphi %s691, %s691
        $region353: #{tpu_custom_call.1} parent=349 // loop_header_branch
          %706 = sbr.rel (%p704) target = $region357
        $region354: #{tpu_custom_call.1} parent=349 // loop_body
          %v710 = vld [vmem:[%s708] sm:%s701]
          %711 = vst [vmem:[%s709] sm:%s701] %v710
          %v712 = vld [vmem:[%s708 + $0x8] sm:%s701]
          %713 = vst [vmem:[%s709 + $0x8] sm:%s701] %v712
        $region355: #{tpu_custom_call.1} parent=349 // loop_footer
          %s707 = sadd.s32 1, %s703
        $region356: #{tpu_custom_call.1} parent=349 // loop_footer_branch
          %702 = sbr.rel target = $region352
        $region357: #{tpu_custom_call.1} parent=349 // loop_exit
          _
      $region350: #{tpu_custom_call.1} parent=11 // pred_fallthru
        _
      // Predicated region
      $region369: #{tpu_custom_call.1} parent=11 // pred_check
        _
      $region370: #{tpu_custom_call.1} parent=11 // pred_check_branch
        %739 = sbr.rel (0) target = $region372
      $region371: #{tpu_custom_call.1} parent=11 // pred_region
        %740 = vsyncadd %s692, 32
      $region372: #{tpu_custom_call.1} parent=11 // pred_fallthru
        _
      %s741 = sadd.s32 %s59, 12
      %s742 = sld [smem:[#allocation4 + %s741]]
      %s743 = sshrl.u32 %s742, 3
      %s744 = sand.u32 %s742, 7
      %s745 = smul.u32 %s743, 16
      %s746 = sadd.s32 %s744, %s745
      %s747 = scalar_lea.vmem %s1, %s746
      %s748 = scalar_lea.vmem %s57, 20
      %s749 = scalar_lea.sflag [#allocation2], 12
      %p751 = scmp.lt.u32.totalorder 1, 8
      %p752 = pneg %p751
      // Predicated region
      $region373: #{tpu_custom_call.1} parent=11 // pred_check
        _
      $region374: #{tpu_custom_call.1} parent=11 // pred_check_branch
        %754 = sbr.rel (%p751) target = $region376
      $region375: #{tpu_custom_call.1} parent=11 // pred_region
        %s771 = sand.u32 1, 7
        %p772 = scmp.eq.s32.totalorder %s771, 0
        %p773 = pneg %p772
        // Predicated region
        $region388: #{tpu_custom_call.1} parent=375 // pred_check
          _
        $region389: #{tpu_custom_call.1} parent=375 // pred_check_branch
          %775 = sbr.rel (%p772) target = $region391
        $region390: #{tpu_custom_call.1} parent=375 // pred_region
          %s776 = sand.u32 1, 7
          %s777 = ssub.s32 1, %s776
          %s778 = scalar_lea.vmem %s747, %s777
          %s779 = ssub.s32 1, %s776
          %s780 = scalar_lea.vmem %s748, %s779
          %s781 = sshllo.u32 0, %s776
          loop: start=0, step=1, limit=1
          $region392: #{tpu_custom_call.1} parent=390 // loop_pre_header
            _
          $region393: #{tpu_custom_call.1} parent=390 // loop_header
            %s783 = sphi 0, %s787
            %p784 = scmp.ge.s32.totalorder %s783, 1
            %s788 = sphi %s778, %s778
            %s789 = sphi %s780, %s780
          $region394: #{tpu_custom_call.1} parent=390 // loop_header_branch
            %786 = sbr.rel (%p784) target = $region398
          $region395: #{tpu_custom_call.1} parent=390 // loop_body
            %v790 = vld [vmem:[%s788] sm:%s781]
            %791 = vst [vmem:[%s789] sm:%s781] %v790
            %v792 = vld [vmem:[%s788 + $0x8] sm:%s781]
            %793 = vst [vmem:[%s789 + $0x8] sm:%s781] %v792
          $region396: #{tpu_custom_call.1} parent=390 // loop_footer
            %s787 = sadd.s32 1, %s783
          $region397: #{tpu_custom_call.1} parent=390 // loop_footer_branch
            %782 = sbr.rel target = $region393
          $region398: #{tpu_custom_call.1} parent=390 // loop_exit
            _
        $region391: #{tpu_custom_call.1} parent=375 // pred_fallthru
          _
      $region376: #{tpu_custom_call.1} parent=11 // pred_fallthru
        _
      // Predicated region
      $region377: #{tpu_custom_call.1} parent=11 // pred_check
        %p755 = pneg %p751
      $region378: #{tpu_custom_call.1} parent=11 // pred_check_branch
        %757 = sbr.rel (%p755) target = $region380
      $region379: #{tpu_custom_call.1} parent=11 // pred_region
        %s758 = sshllo.u32 0, 1
        loop: start=0, step=1, limit=1
        $region381: #{tpu_custom_call.1} parent=379 // loop_pre_header
          _
        $region382: #{tpu_custom_call.1} parent=379 // loop_header
          %s760 = sphi 0, %s764
          %p761 = scmp.ge.s32.totalorder %s760, 1
          %s765 = sphi %s747, %s747
          %s766 = sphi %s748, %s748
        $region383: #{tpu_custom_call.1} parent=379 // loop_header_branch
          %763 = sbr.rel (%p761) target = $region387
        $region384: #{tpu_custom_call.1} parent=379 // loop_body
          %v767 = vld [vmem:[%s765] sm:%s758]
          %768 = vst [vmem:[%s766] sm:%s758] %v767
          %v769 = vld [vmem:[%s765 + $0x8] sm:%s758]
          %770 = vst [vmem:[%s766 + $0x8] sm:%s758] %v769
        $region385: #{tpu_custom_call.1} parent=379 // loop_footer
          %s764 = sadd.s32 1, %s760
        $region386: #{tpu_custom_call.1} parent=379 // loop_footer_branch
          %759 = sbr.rel target = $region382
        $region387: #{tpu_custom_call.1} parent=379 // loop_exit
          _
      $region380: #{tpu_custom_call.1} parent=11 // pred_fallthru
        _
      // Predicated region
      $region399: #{tpu_custom_call.1} parent=11 // pred_check
        _
      $region400: #{tpu_custom_call.1} parent=11 // pred_check_branch
        %796 = sbr.rel (0) target = $region402
      $region401: #{tpu_custom_call.1} parent=11 // pred_region
        %797 = vsyncadd %s749, 32
      $region402: #{tpu_custom_call.1} parent=11 // pred_fallthru
        _
      %s798 = sadd.s32 %s59, 13
      %s799 = sld [smem:[#allocation4 + %s798]]
      %s800 = sshrl.u32 %s799, 3
      %s801 = sand.u32 %s799, 7
      %s802 = smul.u32 %s800, 16
      %s803 = sadd.s32 %s801, %s802
      %s804 = scalar_lea.vmem %s1, %s803
      %s805 = scalar_lea.vmem %s57, 21
      %s806 = scalar_lea.sflag [#allocation2], 13
      %p808 = scmp.lt.u32.totalorder 1, 8
      %p809 = pneg %p808
      // Predicated region
      $region403: #{tpu_custom_call.1} parent=11 // pred_check
        _
      $region404: #{tpu_custom_call.1} parent=11 // pred_check_branch
        %811 = sbr.rel (%p808) target = $region406
      $region405: #{tpu_custom_call.1} parent=11 // pred_region
        %s828 = sand.u32 1, 7
        %p829 = scmp.eq.s32.totalorder %s828, 0
        %p830 = pneg %p829
        // Predicated region
        $region418: #{tpu_custom_call.1} parent=405 // pred_check
          _
        $region419: #{tpu_custom_call.1} parent=405 // pred_check_branch
          %832 = sbr.rel (%p829) target = $region421
        $region420: #{tpu_custom_call.1} parent=405 // pred_region
          %s833 = sand.u32 1, 7
          %s834 = ssub.s32 1, %s833
          %s835 = scalar_lea.vmem %s804, %s834
          %s836 = ssub.s32 1, %s833
          %s837 = scalar_lea.vmem %s805, %s836
          %s838 = sshllo.u32 0, %s833
          loop: start=0, step=1, limit=1
          $region422: #{tpu_custom_call.1} parent=420 // loop_pre_header
            _
          $region423: #{tpu_custom_call.1} parent=420 // loop_header
            %s840 = sphi 0, %s844
            %p841 = scmp.ge.s32.totalorder %s840, 1
            %s845 = sphi %s835, %s835
            %s846 = sphi %s837, %s837
          $region424: #{tpu_custom_call.1} parent=420 // loop_header_branch
            %843 = sbr.rel (%p841) target = $region428
          $region425: #{tpu_custom_call.1} parent=420 // loop_body
            %v847 = vld [vmem:[%s845] sm:%s838]
            %848 = vst [vmem:[%s846] sm:%s838] %v847
            %v849 = vld [vmem:[%s845 + $0x8] sm:%s838]
            %850 = vst [vmem:[%s846 + $0x8] sm:%s838] %v849
          $region426: #{tpu_custom_call.1} parent=420 // loop_footer
            %s844 = sadd.s32 1, %s840
          $region427: #{tpu_custom_call.1} parent=420 // loop_footer_branch
            %839 = sbr.rel target = $region423
          $region428: #{tpu_custom_call.1} parent=420 // loop_exit
            _
        $region421: #{tpu_custom_call.1} parent=405 // pred_fallthru
          _
      $region406: #{tpu_custom_call.1} parent=11 // pred_fallthru
        _
      // Predicated region
      $region407: #{tpu_custom_call.1} parent=11 // pred_check
        %p812 = pneg %p808
      $region408: #{tpu_custom_call.1} parent=11 // pred_check_branch
        %814 = sbr.rel (%p812) target = $region410
      $region409: #{tpu_custom_call.1} parent=11 // pred_region
        %s815 = sshllo.u32 0, 1
        loop: start=0, step=1, limit=1
        $region411: #{tpu_custom_call.1} parent=409 // loop_pre_header
          _
        $region412: #{tpu_custom_call.1} parent=409 // loop_header
          %s817 = sphi 0, %s821
          %p818 = scmp.ge.s32.totalorder %s817, 1
          %s822 = sphi %s804, %s804
          %s823 = sphi %s805, %s805
        $region413: #{tpu_custom_call.1} parent=409 // loop_header_branch
          %820 = sbr.rel (%p818) target = $region417
        $region414: #{tpu_custom_call.1} parent=409 // loop_body
          %v824 = vld [vmem:[%s822] sm:%s815]
          %825 = vst [vmem:[%s823] sm:%s815] %v824
          %v826 = vld [vmem:[%s822 + $0x8] sm:%s815]
          %827 = vst [vmem:[%s823 + $0x8] sm:%s815] %v826
        $region415: #{tpu_custom_call.1} parent=409 // loop_footer
          %s821 = sadd.s32 1, %s817
        $region416: #{tpu_custom_call.1} parent=409 // loop_footer_branch
          %816 = sbr.rel target = $region412
        $region417: #{tpu_custom_call.1} parent=409 // loop_exit
          _
      $region410: #{tpu_custom_call.1} parent=11 // pred_fallthru
        _
      // Predicated region
      $region429: #{tpu_custom_call.1} parent=11 // pred_check
        _
      $region430: #{tpu_custom_call.1} parent=11 // pred_check_branch
        %853 = sbr.rel (0) target = $region432
      $region431: #{tpu_custom_call.1} parent=11 // pred_region
        %854 = vsyncadd %s806, 32
      $region432: #{tpu_custom_call.1} parent=11 // pred_fallthru
        _
      %s855 = sadd.s32 %s59, 14
      %s856 = sld [smem:[#allocation4 + %s855]]
      %s857 = sshrl.u32 %s856, 3
      %s858 = sand.u32 %s856, 7
      %s859 = smul.u32 %s857, 16
      %s860 = sadd.s32 %s858, %s859
      %s861 = scalar_lea.vmem %s1, %s860
      %s862 = scalar_lea.vmem %s57, 22
      %s863 = scalar_lea.sflag [#allocation2], 14
      %p865 = scmp.lt.u32.totalorder 1, 8
      %p866 = pneg %p865
      // Predicated region
      $region433: #{tpu_custom_call.1} parent=11 // pred_check
        _
      $region434: #{tpu_custom_call.1} parent=11 // pred_check_branch
        %868 = sbr.rel (%p865) target = $region436
      $region435: #{tpu_custom_call.1} parent=11 // pred_region
        %s885 = sand.u32 1, 7
        %p886 = scmp.eq.s32.totalorder %s885, 0
        %p887 = pneg %p886
        // Predicated region
        $region448: #{tpu_custom_call.1} parent=435 // pred_check
          _
        $region449: #{tpu_custom_call.1} parent=435 // pred_check_branch
          %889 = sbr.rel (%p886) target = $region451
        $region450: #{tpu_custom_call.1} parent=435 // pred_region
          %s890 = sand.u32 1, 7
          %s891 = ssub.s32 1, %s890
          %s892 = scalar_lea.vmem %s861, %s891
          %s893 = ssub.s32 1, %s890
          %s894 = scalar_lea.vmem %s862, %s893
          %s895 = sshllo.u32 0, %s890
          loop: start=0, step=1, limit=1
          $region452: #{tpu_custom_call.1} parent=450 // loop_pre_header
            _
          $region453: #{tpu_custom_call.1} parent=450 // loop_header
            %s897 = sphi 0, %s901
            %p898 = scmp.ge.s32.totalorder %s897, 1
            %s902 = sphi %s892, %s892
            %s903 = sphi %s894, %s894
          $region454: #{tpu_custom_call.1} parent=450 // loop_header_branch
            %900 = sbr.rel (%p898) target = $region458
          $region455: #{tpu_custom_call.1} parent=450 // loop_body
            %v904 = vld [vmem:[%s902] sm:%s895]
            %905 = vst [vmem:[%s903] sm:%s895] %v904
            %v906 = vld [vmem:[%s902 + $0x8] sm:%s895]
            %907 = vst [vmem:[%s903 + $0x8] sm:%s895] %v906
          $region456: #{tpu_custom_call.1} parent=450 // loop_footer
            %s901 = sadd.s32 1, %s897
          $region457: #{tpu_custom_call.1} parent=450 // loop_footer_branch
            %896 = sbr.rel target = $region453
          $region458: #{tpu_custom_call.1} parent=450 // loop_exit
            _
        $region451: #{tpu_custom_call.1} parent=435 // pred_fallthru
          _
      $region436: #{tpu_custom_call.1} parent=11 // pred_fallthru
        _
      // Predicated region
      $region437: #{tpu_custom_call.1} parent=11 // pred_check
        %p869 = pneg %p865
      $region438: #{tpu_custom_call.1} parent=11 // pred_check_branch
        %871 = sbr.rel (%p869) target = $region440
      $region439: #{tpu_custom_call.1} parent=11 // pred_region
        %s872 = sshllo.u32 0, 1
        loop: start=0, step=1, limit=1
        $region441: #{tpu_custom_call.1} parent=439 // loop_pre_header
          _
        $region442: #{tpu_custom_call.1} parent=439 // loop_header
          %s874 = sphi 0, %s878
          %p875 = scmp.ge.s32.totalorder %s874, 1
          %s879 = sphi %s861, %s861
          %s880 = sphi %s862, %s862
        $region443: #{tpu_custom_call.1} parent=439 // loop_header_branch
          %877 = sbr.rel (%p875) target = $region447
        $region444: #{tpu_custom_call.1} parent=439 // loop_body
          %v881 = vld [vmem:[%s879] sm:%s872]
          %882 = vst [vmem:[%s880] sm:%s872] %v881
          %v883 = vld [vmem:[%s879 + $0x8] sm:%s872]
          %884 = vst [vmem:[%s880 + $0x8] sm:%s872] %v883
        $region445: #{tpu_custom_call.1} parent=439 // loop_footer
          %s878 = sadd.s32 1, %s874
        $region446: #{tpu_custom_call.1} parent=439 // loop_footer_branch
          %873 = sbr.rel target = $region442
        $region447: #{tpu_custom_call.1} parent=439 // loop_exit
          _
      $region440: #{tpu_custom_call.1} parent=11 // pred_fallthru
        _
      // Predicated region
      $region459: #{tpu_custom_call.1} parent=11 // pred_check
        _
      $region460: #{tpu_custom_call.1} parent=11 // pred_check_branch
        %910 = sbr.rel (0) target = $region462
      $region461: #{tpu_custom_call.1} parent=11 // pred_region
        %911 = vsyncadd %s863, 32
      $region462: #{tpu_custom_call.1} parent=11 // pred_fallthru
        _
      %s912 = sadd.s32 %s59, 15
      %s913 = sld [smem:[#allocation4 + %s912]]
      %s914 = sshrl.u32 %s913, 3
      %s915 = sand.u32 %s913, 7
      %s916 = smul.u32 %s914, 16
      %s917 = sadd.s32 %s915, %s916
      %s918 = scalar_lea.vmem %s1, %s917
      %s919 = scalar_lea.vmem %s57, 23
      %s920 = scalar_lea.sflag [#allocation2], 15
      %p922 = scmp.lt.u32.totalorder 1, 8
      %p923 = pneg %p922
      // Predicated region
      $region463: #{tpu_custom_call.1} parent=11 // pred_check
        _
      $region464: #{tpu_custom_call.1} parent=11 // pred_check_branch
        %925 = sbr.rel (%p922) target = $region466
      $region465: #{tpu_custom_call.1} parent=11 // pred_region
        %s942 = sand.u32 1, 7
        %p943 = scmp.eq.s32.totalorder %s942, 0
        %p944 = pneg %p943
        // Predicated region
        $region478: #{tpu_custom_call.1} parent=465 // pred_check
          _
        $region479: #{tpu_custom_call.1} parent=465 // pred_check_branch
          %946 = sbr.rel (%p943) target = $region481
        $region480: #{tpu_custom_call.1} parent=465 // pred_region
          %s947 = sand.u32 1, 7
          %s948 = ssub.s32 1, %s947
          %s949 = scalar_lea.vmem %s918, %s948
          %s950 = ssub.s32 1, %s947
          %s951 = scalar_lea.vmem %s919, %s950
          %s952 = sshllo.u32 0, %s947
          loop: start=0, step=1, limit=1
          $region482: #{tpu_custom_call.1} parent=480 // loop_pre_header
            _
          $region483: #{tpu_custom_call.1} parent=480 // loop_header
            %s954 = sphi 0, %s958
            %p955 = scmp.ge.s32.totalorder %s954, 1
            %s959 = sphi %s949, %s949
            %s960 = sphi %s951, %s951
          $region484: #{tpu_custom_call.1} parent=480 // loop_header_branch
            %957 = sbr.rel (%p955) target = $region488
          $region485: #{tpu_custom_call.1} parent=480 // loop_body
            %v961 = vld [vmem:[%s959] sm:%s952]
            %962 = vst [vmem:[%s960] sm:%s952] %v961
            %v963 = vld [vmem:[%s959 + $0x8] sm:%s952]
            %964 = vst [vmem:[%s960 + $0x8] sm:%s952] %v963
          $region486: #{tpu_custom_call.1} parent=480 // loop_footer
            %s958 = sadd.s32 1, %s954
          $region487: #{tpu_custom_call.1} parent=480 // loop_footer_branch
            %953 = sbr.rel target = $region483
          $region488: #{tpu_custom_call.1} parent=480 // loop_exit
            _
        $region481: #{tpu_custom_call.1} parent=465 // pred_fallthru
          _
      $region466: #{tpu_custom_call.1} parent=11 // pred_fallthru
        _
      // Predicated region
      $region467: #{tpu_custom_call.1} parent=11 // pred_check
        %p926 = pneg %p922
      $region468: #{tpu_custom_call.1} parent=11 // pred_check_branch
        %928 = sbr.rel (%p926) target = $region470
      $region469: #{tpu_custom_call.1} parent=11 // pred_region
        %s929 = sshllo.u32 0, 1
        loop: start=0, step=1, limit=1
        $region471: #{tpu_custom_call.1} parent=469 // loop_pre_header
          _
        $region472: #{tpu_custom_call.1} parent=469 // loop_header
          %s931 = sphi 0, %s935
          %p932 = scmp.ge.s32.totalorder %s931, 1
          %s936 = sphi %s918, %s918
          %s937 = sphi %s919, %s919
        $region473: #{tpu_custom_call.1} parent=469 // loop_header_branch
          %934 = sbr.rel (%p932) target = $region477
        $region474: #{tpu_custom_call.1} parent=469 // loop_body
          %v938 = vld [vmem:[%s936] sm:%s929]
          %939 = vst [vmem:[%s937] sm:%s929] %v938
          %v940 = vld [vmem:[%s936 + $0x8] sm:%s929]
          %941 = vst [vmem:[%s937 + $0x8] sm:%s929] %v940
        $region475: #{tpu_custom_call.1} parent=469 // loop_footer
          %s935 = sadd.s32 1, %s931
        $region476: #{tpu_custom_call.1} parent=469 // loop_footer_branch
          %930 = sbr.rel target = $region472
        $region477: #{tpu_custom_call.1} parent=469 // loop_exit
          _
      $region470: #{tpu_custom_call.1} parent=11 // pred_fallthru
        _
      // Predicated region
      $region489: #{tpu_custom_call.1} parent=11 // pred_check
        _
      $region490: #{tpu_custom_call.1} parent=11 // pred_check_branch
        %967 = sbr.rel (0) target = $region492
      $region491: #{tpu_custom_call.1} parent=11 // pred_region
        %968 = vsyncadd %s920, 32
      $region492: #{tpu_custom_call.1} parent=11 // pred_fallthru
        _
      loop: start=0, step=1, limit=112
      $region493: #{tpu_custom_call.1} parent=11 // loop_pre_header
        _
      $region494: #{tpu_custom_call.1} parent=11 // loop_header
        %s970 = sphi 0, %s974
        %p971 = scmp.ge.s32.totalorder %s970, 112
      $region495: #{tpu_custom_call.1} parent=11 // loop_header_branch
        %973 = sbr.rel (%p971) target = $region499
      $region496: #{tpu_custom_call.1} parent=11 // loop_body
        %p975 = scmp.lt.s32.totalorder %s970, 0
        %s976 = ssub.s32 0, %s970
        %s977 = scalar_select %p975, %s976, %s970
        %s978 = sand.u32 %s977, 15
        %s979 = ssub.s32 0, %s978
        %s980 = scalar_select %p975, %s979, %s978
        %p981 = scmp.ne.s32.totalorder %s980, 0
        %p982 = scmp.lt.s32.totalorder %s980, 0
        %p983 = pnand %p982, %p981
        %p984 = pneg %p983
        %s985 = sadd.s32 %s980, 16
        %s986 = scalar_select %p984, %s985, %s980
        %s987 = scalar_lea.sflag [#allocation2], %s986
        %989 = dma.done %s987, 32
        %s990 = sadd.s32 %s970, 16
        %s991 = sadd.s32 %s59, %s990
        %s992 = sld [smem:[#allocation4 + %s991]]
        %s993 = sshrl.u32 %s992, 3
        %s994 = sand.u32 %s992, 7
        %s995 = smul.u32 %s993, 16
        %s996 = sadd.s32 %s994, %s995
        %s997 = scalar_lea.vmem %s1, %s996
        %s998 = sshrl.u32 %s990, 3
        %s999 = sand.u32 %s990, 7
        %s1000 = smul.u32 %s998, 16
        %s1001 = sadd.s32 %s999, %s1000
        %s1002 = scalar_lea.vmem %s57, %s1001
        %p1004 = scmp.lt.u32.totalorder 1, 8
        %p1005 = pneg %p1004
        // Predicated region
        $region500: #{tpu_custom_call.1} parent=496 // pred_check
          _
        $region501: #{tpu_custom_call.1} parent=496 // pred_check_branch
          %1007 = sbr.rel (%p1004) target = $region503
        $region502: #{tpu_custom_call.1} parent=496 // pred_region
          %s1024 = sand.u32 1, 7
          %p1025 = scmp.eq.s32.totalorder %s1024, 0
          %p1026 = pneg %p1025
          // Predicated region
          $region515: #{tpu_custom_call.1} parent=502 // pred_check
            _
          $region516: #{tpu_custom_call.1} parent=502 // pred_check_branch
            %1028 = sbr.rel (%p1025) target = $region518
          $region517: #{tpu_custom_call.1} parent=502 // pred_region
            %s1029 = sand.u32 1, 7
            %s1030 = ssub.s32 1, %s1029
            %s1031 = scalar_lea.vmem %s997, %s1030
            %s1032 = ssub.s32 1, %s1029
            %s1033 = scalar_lea.vmem %s1002, %s1032
            %s1034 = sshllo.u32 0, %s1029
            loop: start=0, step=1, limit=1
            $region519: #{tpu_custom_call.1} parent=517 // loop_pre_header
              _
            $region520: #{tpu_custom_call.1} parent=517 // loop_header
              %s1036 = sphi 0, %s1040
              %p1037 = scmp.ge.s32.totalorder %s1036, 1
              %s1041 = sphi %s1031, %s1031
              %s1042 = sphi %s1033, %s1033
            $region521: #{tpu_custom_call.1} parent=517 // loop_header_branch
              %1039 = sbr.rel (%p1037) target = $region525
            $region522: #{tpu_custom_call.1} parent=517 // loop_body
              %v1043 = vld [vmem:[%s1041] sm:%s1034]
              %1044 = vst [vmem:[%s1042] sm:%s1034] %v1043
              %v1045 = vld [vmem:[%s1041 + $0x8] sm:%s1034]
              %1046 = vst [vmem:[%s1042 + $0x8] sm:%s1034] %v1045
            $region523: #{tpu_custom_call.1} parent=517 // loop_footer
              %s1040 = sadd.s32 1, %s1036
            $region524: #{tpu_custom_call.1} parent=517 // loop_footer_branch
              %1035 = sbr.rel target = $region520
            $region525: #{tpu_custom_call.1} parent=517 // loop_exit
              _
          $region518: #{tpu_custom_call.1} parent=502 // pred_fallthru
            _
        $region503: #{tpu_custom_call.1} parent=496 // pred_fallthru
          _
        // Predicated region
        $region504: #{tpu_custom_call.1} parent=496 // pred_check
          %p1008 = pneg %p1004
        $region505: #{tpu_custom_call.1} parent=496 // pred_check_branch
          %1010 = sbr.rel (%p1008) target = $region507
        $region506: #{tpu_custom_call.1} parent=496 // pred_region
          %s1011 = sshllo.u32 0, 1
          loop: start=0, step=1, limit=1
          $region508: #{tpu_custom_call.1} parent=506 // loop_pre_header
            _
          $region509: #{tpu_custom_call.1} parent=506 // loop_header
            %s1013 = sphi 0, %s1017
            %p1014 = scmp.ge.s32.totalorder %s1013, 1
            %s1018 = sphi %s997, %s997
            %s1019 = sphi %s1002, %s1002
          $region510: #{tpu_custom_call.1} parent=506 // loop_header_branch
            %1016 = sbr.rel (%p1014) target = $region514
          $region511: #{tpu_custom_call.1} parent=506 // loop_body
            %v1020 = vld [vmem:[%s1018] sm:%s1011]
            %1021 = vst [vmem:[%s1019] sm:%s1011] %v1020
            %v1022 = vld [vmem:[%s1018 + $0x8] sm:%s1011]
            %1023 = vst [vmem:[%s1019 + $0x8] sm:%s1011] %v1022
          $region512: #{tpu_custom_call.1} parent=506 // loop_footer
            %s1017 = sadd.s32 1, %s1013
          $region513: #{tpu_custom_call.1} parent=506 // loop_footer_branch
            %1012 = sbr.rel target = $region509
          $region514: #{tpu_custom_call.1} parent=506 // loop_exit
            _
        $region507: #{tpu_custom_call.1} parent=496 // pred_fallthru
          _
        // Predicated region
        $region526: #{tpu_custom_call.1} parent=496 // pred_check
          _
        $region527: #{tpu_custom_call.1} parent=496 // pred_check_branch
          %1049 = sbr.rel (0) target = $region529
        $region528: #{tpu_custom_call.1} parent=496 // pred_region
          %1050 = vsyncadd %s987, 32
        $region529: #{tpu_custom_call.1} parent=496 // pred_fallthru
          _
      $region497: #{tpu_custom_call.1} parent=11 // loop_footer
        %s974 = sadd.s32 1, %s970
      $region498: #{tpu_custom_call.1} parent=11 // loop_footer_branch
        %969 = sbr.rel target = $region494
      $region499: #{tpu_custom_call.1} parent=11 // loop_exit
        _
      %1052 = dma.done [#allocation2], 32
      %1054 = dma.done %s122, 32
      %1056 = dma.done %s179, 32
      %1058 = dma.done %s236, 32
      %1060 = dma.done %s293, 32
      %1062 = dma.done %s350, 32
      %1064 = dma.done %s407, 32
      %1066 = dma.done %s464, 32
      %1068 = dma.done %s521, 32
      %1070 = dma.done %s578, 32
      %1072 = dma.done %s635, 32
      %1074 = dma.done %s692, 32
      %1076 = dma.done %s749, 32
      %1078 = dma.done %s806, 32
      %1080 = dma.done %s863, 32
      %1082 = dma.done %s920, 32
      %s1083 = smul.u32 16, %s14
      %p1084 = scmp.lt.s32.totalorder %s1083, 79
      %s1085 = scalar_select %p1084, %s1083, 79
      %s1086 = smul.addr %s1085, 2
      %s1087 = smul.addr %s1086, 8
      %s1088 = scalar_lea.vmem %s2, %s1087
      // Predicated region
      $region530: #{tpu_custom_call.1} parent=11 // pred_check
        %p1089 = pneg %p29
      $region531: #{tpu_custom_call.1} parent=11 // pred_check_branch
        %1091 = sbr.rel (%p1089) target = $region533
      $region532: #{tpu_custom_call.1} parent=11 // pred_region
        %s1092 = smul.u32 16, %s14
      $region533: #{tpu_custom_call.1} parent=11 // pred_fallthru
        _
    $region12: #{tpu_custom_call.1} parent=5 // pred_fallthru
      _
    %p1093 = scmp.le.s32.totalorder 1, %s14
    // Predicated region
    $region534: #{tpu_custom_call.1} parent=5 // pred_check
      %p1094 = pneg %p1093
    $region535: #{tpu_custom_call.1} parent=5 // pred_check_branch
      %1096 = sbr.rel (%p1094) target = $region537
    $region536: #{tpu_custom_call.1} parent=5 // pred_region
      %s1097 = ssub.s32 %s14, 1
      // Predicated region
      $region538: #{tpu_custom_call.1} parent=536 // pred_check
        %p1098 = pneg %p35
      $region539: #{tpu_custom_call.1} parent=536 // pred_check_branch
        %1100 = sbr.rel (%p1098) target = $region541
      $region540: #{tpu_custom_call.1} parent=536 // pred_region
        %s1101 = smul.u32 16, %s19
        %p1102 = scmp.lt.s32.totalorder %s1101, 79
        %s1103 = scalar_select %p1102, %s1101, 79
        %s1104 = smul.addr %s1103, 2
        %s1105 = smul.addr %s1104, 8
        %s1106 = scalar_lea.vmem %s2, %s1105
      $region541: #{tpu_custom_call.1} parent=536 // pred_fallthru
        _
    $region537: #{tpu_custom_call.1} parent=5 // pred_fallthru
      _
  $region6: #{tpu_custom_call.1} parent=0 // loop_footer
    %s18 = sadd.s32 1, %s14
  $region7: #{tpu_custom_call.1} parent=0 // loop_footer_branch
    %13 = sbr.rel target = $region3
  $region8: #{tpu_custom_call.1} parent=0 // loop_exit
    _
  %1107 = vsyncmov [#allocation2]
  %s1108 = vpop.sfrf %1107
  %p1109 = scmp.eq.s32.totalorder %s1108, 0
  %p1110 = pneg %p1109
  %1112 = shalt.err (%p1110)
  %s1113 = scalar_lea.sflag [#allocation2], 1
  %1114 = vsyncmov %s1113
  %s1115 = vpop.sfrf %1114
  %p1116 = scmp.eq.s32.totalorder %s1115, 0
  %p1117 = pneg %p1116
  %1119 = shalt.err (%p1117)
  %s1120 = scalar_lea.sflag [#allocation2], 2
  %1121 = vsyncmov %s1120
  %s1122 = vpop.sfrf %1121
  %p1123 = scmp.eq.s32.totalorder %s1122, 0
  %p1124 = pneg %p1123
  %1126 = shalt.err (%p1124)
  %s1127 = scalar_lea.sflag [#allocation2], 3
  %1128 = vsyncmov %s1127
  %s1129 = vpop.sfrf %1128
  %p1130 = scmp.eq.s32.totalorder %s1129, 0
  %p1131 = pneg %p1130
  %1133 = shalt.err (%p1131)
  %s1134 = scalar_lea.sflag [#allocation2], 4
  %1135 = vsyncmov %s1134
  %s1136 = vpop.sfrf %1135
  %p1137 = scmp.eq.s32.totalorder %s1136, 0
  %p1138 = pneg %p1137
  %1140 = shalt.err (%p1138)
  %s1141 = scalar_lea.sflag [#allocation2], 5
  %1142 = vsyncmov %s1141
  %s1143 = vpop.sfrf %1142
  %p1144 = scmp.eq.s32.totalorder %s1143, 0
  %p1145 = pneg %p1144
  %1147 = shalt.err (%p1145)
  %s1148 = scalar_lea.sflag [#allocation2], 6
  %1149 = vsyncmov %s1148
  %s1150 = vpop.sfrf %1149
  %p1151 = scmp.eq.s32.totalorder %s1150, 0
  %p1152 = pneg %p1151
  %1154 = shalt.err (%p1152)
  %s1155 = scalar_lea.sflag [#allocation2], 7
  %1156 = vsyncmov %s1155
  %s1157 = vpop.sfrf %1156
  %p1158 = scmp.eq.s32.totalorder %s1157, 0
  %p1159 = pneg %p1158
  %1161 = shalt.err (%p1159)
  %s1162 = scalar_lea.sflag [#allocation2], 8
  %1163 = vsyncmov %s1162
  %s1164 = vpop.sfrf %1163
  %p1165 = scmp.eq.s32.totalorder %s1164, 0
  %p1166 = pneg %p1165
  %1168 = shalt.err (%p1166)
  %s1169 = scalar_lea.sflag [#allocation2], 9
  %1170 = vsyncmov %s1169
  %s1171 = vpop.sfrf %1170
  %p1172 = scmp.eq.s32.totalorder %s1171, 0
  %p1173 = pneg %p1172
  %1175 = shalt.err (%p1173)
  %s1176 = scalar_lea.sflag [#allocation2], 10
  %1177 = vsyncmov %s1176
  %s1178 = vpop.sfrf %1177
  %p1179 = scmp.eq.s32.totalorder %s1178, 0
  %p1180 = pneg %p1179
  %1182 = shalt.err (%p1180)
  %s1183 = scalar_lea.sflag [#allocation2], 11
  %1184 = vsyncmov %s1183
  %s1185 = vpop.sfrf %1184
  %p1186 = scmp.eq.s32.totalorder %s1185, 0
  %p1187 = pneg %p1186
  %1189 = shalt.err (%p1187)
  %s1190 = scalar_lea.sflag [#allocation2], 12
  %1191 = vsyncmov %s1190
  %s1192 = vpop.sfrf %1191
  %p1193 = scmp.eq.s32.totalorder %s1192, 0
  %p1194 = pneg %p1193
  %1196 = shalt.err (%p1194)
  %s1197 = scalar_lea.sflag [#allocation2], 13
  %1198 = vsyncmov %s1197
  %s1199 = vpop.sfrf %1198
  %p1200 = scmp.eq.s32.totalorder %s1199, 0
  %p1201 = pneg %p1200
  %1203 = shalt.err (%p1201)
  %s1204 = scalar_lea.sflag [#allocation2], 14
  %1205 = vsyncmov %s1204
  %s1206 = vpop.sfrf %1205
  %p1207 = scmp.eq.s32.totalorder %s1206, 0
  %p1208 = pneg %p1207
  %1210 = shalt.err (%p1208)
  %s1211 = scalar_lea.sflag [#allocation2], 15
  %1212 = vsyncmov %s1211
  %s1213 = vpop.sfrf %1212
  %p1214 = scmp.eq.s32.totalorder %s1213, 0
  %p1215 = pneg %p1214
  %1217 = shalt.err (%p1215)

</llo_original>
